<compile_context>
chip_gen: v7x
topology: tpu7x:2x2x1
jax: 0.10.0
libtpu: 0.0.40
codegen_flags: <defaults>
</compile_context>

<pallas_src>
import numpy as np
import jax
import jax.numpy as jnp
from jax import lax
from jax.experimental import pallas as pl
from jax.experimental.pallas import tpu as pltpu

COMPUTE_DTYPE = jnp.bfloat16   # matmul operand dtype (accumulation stays f32)


def _round_up(x, m):
    return (int(x) + m - 1) // m * m


# ----------------------------- Pallas kernels -----------------------------

def _bilstm_kernel(x_ref, lens_ref, wih_ref, whh_f_ref, whh_b_ref, b_ref,
                   y_ref, gin_ref, ysf_ref, ysb_ref):
    """Single-layer bidirectional LSTM over a padded batch (time-major).

    x_ref:     (T, B_pad, D_pad)      input features (compute dtype)
    lens_ref:  (B_pad, 1) int32       valid length per (duplicated) sentence
    wih_ref:   (D_pad, 8H)            [W_ih_fwd | W_ih_bwd]  (compute dtype)
    whh_*_ref: (H, 4H)                recurrent weights      (compute dtype)
    b_ref:     (1, 8H) f32            [b_fwd | b_bwd]  (b_ih + b_hh pre-summed)
    y_ref:     (T, B_pad, HO) f32     HO = round_up(2H,128); fwd=[:H], bwd=[H:2H]
    gin_ref:   (T, B_pad, 8H) f32     scratch: hoisted input projection (+bias)
    ysf_ref:   (T, B_pad, H) f32      scratch: fwd per-step outputs
    ysb_ref:   (T, B_pad, H) f32      scratch: bwd per-step outputs
    Gate order per direction: i, f, g, o (PyTorch convention).
    """
    T, B, D = x_ref.shape
    H = whh_f_ref.shape[0]
    G = 4 * H
    HO = y_ref.shape[-1]
    cdt = whh_f_ref.dtype
    f32 = jnp.float32

    # ---- phase 1: hoisted input projection — one big MXU matmul, bias folded.
    x_flat = x_ref[...].reshape(T * B, D)
    gin = jnp.dot(x_flat, wih_ref[...], preferred_element_type=f32) + b_ref[...]
    gin_ref[...] = gin.reshape(T, B, 2 * G)

    # ---- phase 2: fused fwd/bwd recurrence (only tiny h @ Whh per step).
    lens = lens_ref[...]                      # (B, 1) int32
    whh_f = whh_f_ref[...]
    whh_b = whh_b_ref[...]

    def cell(gates_pre, h_prev, c_prev, whh, m):
        gates = gates_pre + jnp.dot(h_prev.astype(cdt), whh,
                                    preferred_element_type=f32)
        sg = jax.nn.sigmoid(gates)            # one full-width EUP pass
        tg = jnp.tanh(gates)                  # one full-width EUP pass
        i = sg[:, 0 * H:1 * H]
        f = sg[:, 1 * H:2 * H]
        g = tg[:, 2 * H:3 * H]
        o = sg[:, 3 * H:4 * H]
        c_new = f * c_prev + i * g
        h_new = o * jnp.tanh(c_new)
        # packed-sequence semantics: freeze state / zero output at padded steps
        c_out = jnp.where(m, c_new, c_prev)
        h_out = jnp.where(m, h_new, h_prev)
        y_t = jnp.where(m, h_new, 0.0)
        return h_out, c_out, y_t

    def body(t, carry):
        h_f, c_f, h_b, c_b = carry
        tb = T - 1 - t
        g_t = gin_ref[t]                      # (B, 8H)
        g_tb = gin_ref[tb]
        m_f = lens > t
        m_b = lens > tb
        h_f, c_f, yf_t = cell(g_t[:, :G], h_f, c_f, whh_f, m_f)
        h_b, c_b, yb_t = cell(g_tb[:, G:], h_b, c_b, whh_b, m_b)
        ysf_ref[t] = yf_t
        ysb_ref[tb] = yb_t
        return h_f, c_f, h_b, c_b

    z = jnp.zeros((B, H), f32)
    unroll = True if T <= 16 else 4
    lax.fori_loop(0, T, body, (z, z, z, z), unroll=unroll)

    # ---- phase 3: single lane-dense output store (in-kernel fwd|bwd concat).
    parts = [ysf_ref[...], ysb_ref[...]]
    if HO > 2 * H:
        parts.append(jnp.zeros((T, B, HO - 2 * H), f32))
    y_ref[...] = jnp.concatenate(parts, axis=-1)


def _linear_kernel(x_ref, w_ref, b_ref, o_ref):
    o_ref[...] = (jnp.dot(x_ref[...], w_ref[...],
                          preferred_element_type=jnp.float32) + b_ref[...])


# ----------------------------- wrappers -----------------------------------

def _full_spec(shape):
    nd = len(shape)
    return pl.BlockSpec(tuple(int(s) for s in shape),
                        lambda i, _nd=nd: (0,) * _nd)


def pallas_bilstm(x, lens, wih_f, whh_f, b_f, wih_b, whh_b, b_b,
                  *, compute_dtype=COMPUTE_DTYPE):
    """x: (T, B, DIN) f32 time-major, lens: (B,) int -> y: (T, B, 2H) f32."""
    T, B, DIN = x.shape
    H = int(np.asarray(whh_f).shape[0])
    B_pad = _round_up(B, 8)
    D_pad = _round_up(DIN, 128)
    HO = _round_up(2 * H, 128)

    xp = jnp.pad(jnp.asarray(x, jnp.float32),
                 ((0, 0), (0, B_pad - B), (0, D_pad - DIN))).astype(compute_dtype)
    lens_p = jnp.pad(jnp.asarray(lens, jnp.int32), (0, B_pad - B))[:, None]
    wih = jnp.pad(
        jnp.concatenate([jnp.asarray(wih_f, jnp.float32),
                         jnp.asarray(wih_b, jnp.float32)], axis=1),
        ((0, D_pad - DIN), (0, 0))).astype(compute_dtype)
    whhf = jnp.asarray(whh_f, jnp.float32).astype(compute_dtype)
    whhb = jnp.asarray(whh_b, jnp.float32).astype(compute_dtype)
    # b assumed = b_ih + b_hh (pre-summed).
    bcat = jnp.concatenate([jnp.asarray(b_f, jnp.float32).reshape(1, 4 * H),
                            jnp.asarray(b_b, jnp.float32).reshape(1, 4 * H)],
                           axis=1)

    args = (xp, lens_p, wih, whhf, whhb, bcat)
    out_sd = jax.ShapeDtypeStruct((T, B_pad, HO), jnp.float32)

    itemsz = jnp.dtype(compute_dtype).itemsize
    weight_bytes = (wih.size + whhf.size + whhb.size) * itemsz + bcat.size * 4
    cost = pl.CostEstimate(
        flops=int(2 * T * B_pad * D_pad * 8 * H          # hoisted input proj
                  + 2 * 2 * T * B_pad * H * 4 * H        # recurrent matmuls
                  + 20 * T * B_pad * H),                 # elementwise
        transcendentals=int(2 * T * B_pad * 9 * H),
        bytes_accessed=int(xp.size * itemsz + T * B_pad * HO * 4
                           + weight_bytes + lens_p.size * 4))

    scratch_bytes = (T * B_pad * 8 * H + 2 * T * B_pad * H) * 4
    io_bytes = 2 * (xp.size * itemsz + T * B_pad * HO * 4) + 2 * weight_bytes
    vmem_limit = int(min(32 * 2 ** 20,
                         max(io_bytes + scratch_bytes + (2 << 20), 4 * 2 ** 20)))

    y = pl.pallas_call(
        _bilstm_kernel,
        out_shape=out_sd,
        grid=(1,),
        in_specs=[_full_spec(a.shape) for a in args],
        out_specs=_full_spec(out_sd.shape),
        scratch_shapes=[
            pltpu.VMEM((T, B_pad, 8 * H), jnp.float32),   # hoisted projection
            pltpu.VMEM((T, B_pad, H), jnp.float32),       # fwd outputs
            pltpu.VMEM((T, B_pad, H), jnp.float32),       # bwd outputs
        ],
        compiler_params=pltpu.CompilerParams(
            dimension_semantics=("arbitrary",),
            vmem_limit_bytes=vmem_limit),
        cost_estimate=cost,
    )(*args)
    return y[:, :B, :2 * H]


def pallas_linear(x, w, b, *, tile_n=512, compute_dtype=COMPUTE_DTYPE):
    """x: (N, K) f32, w: (K, R), b: (1, R) -> (N, R) f32. Row-tiled, parallel."""
    N, K = x.shape
    R = int(np.asarray(w).shape[1])
    K_pad = _round_up(K, 128)
    R_pad = _round_up(R, 128)
    tile_n = min(tile_n, _round_up(N, 8))
    N_pad = _round_up(N, tile_n)

    xp = jnp.pad(jnp.asarray(x, jnp.float32),
                 ((0, N_pad - N), (0, K_pad - K))).astype(compute_dtype)
    wp = jnp.pad(jnp.asarray(w, jnp.float32),
                 ((0, K_pad - K), (0, R_pad - R))).astype(compute_dtype)
    bp = jnp.pad(jnp.asarray(b, jnp.float32).reshape(1, R),
                 ((0, 0), (0, R_pad - R)))

    itemsz = jnp.dtype(compute_dtype).itemsize
    cost = pl.CostEstimate(
        flops=int(2 * N_pad * K_pad * R_pad), transcendentals=0,
        bytes_accessed=int(xp.size * itemsz + wp.size * itemsz + N_pad * R_pad * 4))

    out = pl.pallas_call(
        _linear_kernel,
        out_shape=jax.ShapeDtypeStruct((N_pad, R_pad), jnp.float32),
        grid=(N_pad // tile_n,),
        in_specs=[pl.BlockSpec((tile_n, K_pad), lambda i: (i, 0)),
                  pl.BlockSpec((K_pad, R_pad), lambda i: (0, 0)),
                  pl.BlockSpec((1, R_pad), lambda i: (0, 0))],
        out_specs=pl.BlockSpec((tile_n, R_pad), lambda i: (i, 0)),
        compiler_params=pltpu.CompilerParams(
            dimension_semantics=("parallel",)),
        cost_estimate=cost,
    )(xp, wp, bp)
    return out[:N, :R]


# ----------------------------- forward pass --------------------------------

def bilstm_forward(w, sentences, lens, pos_tags, predicates, lemmas,
                   predicate_null_token):
    """Reproduces BiLSTM.forward with task_234=False, eval mode."""
    sentences = np.asarray(sentences, dtype=np.float32)
    lens = np.asarray(lens, dtype=np.int64)
    pos_tags = np.asarray(pos_tags, dtype=np.int64)
    predicates = np.asarray(predicates, dtype=np.int64)
    lemmas = np.asarray(lemmas, dtype=np.int64)
    B, T, E = sentences.shape

    # --- _get_number_predicates (data-dependent -> host numpy) --------------
    num_predicates = (predicates != predicate_null_token).sum(axis=1)
    indices_no_predicates = np.nonzero(num_predicates == 0)[0]
    num_predicates = num_predicates.copy()
    num_predicates[indices_no_predicates] = 1
    indices_predicates = np.argwhere(predicates != predicate_null_token)

    # --- _duplicate_sentences (repeat_interleave) ---------------------------
    sent_d = np.repeat(sentences, num_predicates, axis=0)
    lens_d = np.repeat(lens, num_predicates, axis=0)
    pos_d = np.repeat(pos_tags, num_predicates, axis=0)
    lem_d = np.repeat(lemmas, num_predicates, axis=0)
    Bp = sent_d.shape[0]

    # --- _get_one_hot_predicates -------------------------------------------
    swp = np.concatenate(
        [indices_predicates,
         np.ones((indices_predicates.shape[0], 1), dtype=np.int64)], axis=-1)
    swop = np.concatenate(
        [indices_no_predicates[:, None],
         np.zeros((indices_no_predicates.shape[0], 2), dtype=np.int64)], axis=-1)
    pwoh = np.concatenate([swp, swop], axis=0)
    pwoh = pwoh[np.argsort(pwoh[:, 1])]
    pwoh = pwoh[np.argsort(pwoh[:, 0], kind='stable')]

    # predicates_indicators (scatter)
    pred_ind = np.zeros((Bp, T), dtype=np.int64)
    pred_ind[np.arange(Bp), pwoh[:, 1]] = pwoh[:, 2]

    out = np.concatenate([sent_d, pred_ind[..., None].astype(np.float32)], axis=-1)

    # --- task_234 == False branch: _expand_predicates + embeddings ----------
    new_predicates = predicates[indices_predicates[:, 0], indices_predicates[:, 1]]
    preds_exp = np.full((Bp, T), predicate_null_token, dtype=np.int64)
    idx_split = np.argwhere(pred_ind == 1)
    preds_exp[idx_split[:, 0], idx_split[:, 1]] = new_predicates
    mask_lens = (np.arange(T)[None, :] < lens_d[:, None]).astype(np.int64)
    preds_exp = preds_exp * mask_lens

    embeds_predicates = w['pred_emb'][preds_exp]          # (Bp, T, pred_dim)
    embeds_pos = w['pos_emb'][pos_d]                      # (Bp, T, pos_dim)
    out = np.concatenate([out, embeds_pos], axis=-1)

    # --- _roles_disambiguation ----------------------------------------------
    out = np.concatenate([out, embeds_predicates], axis=-1)
    embeds_lemmas = w['lem_emb'][lem_d]
    out = np.concatenate([out, embeds_lemmas], axis=-1)   # (Bp, T, DIN)
    # dropout: identity (eval mode / p = 0.0)

    x_tm = np.ascontiguousarray(np.transpose(out, (1, 0, 2)), dtype=np.float32)   # (T, Bp, DIN)
    valid = (np.arange(T)[None, :] < lens_d[:, None]).astype(np.float32)           # (Bp, T)
    mask_tm = np.transpose(valid, (1, 0))[..., None].astype(np.float32)            # reference only

    # BiLSTM kernel returns the already-concatenated [fwd | bwd] output.
    y_tm = pallas_bilstm(jnp.asarray(x_tm), lens_d,
                         w['wih_f'], w['whh_f'], w['b_f'],
                         w['wih_b'], w['whh_b'], w['b_b'])        # (T, Bp, 2H)
    y = jnp.transpose(y_tm, (1, 0, 2))                             # (Bp, T, 2H)

    pred_pos = pwoh[:, 1].astype(np.int32)
    pred_mask = pwoh[:, 2].astype(np.float32)
    hidden_predicates = y[jnp.arange(Bp), jnp.asarray(pred_pos)]      # (Bp, 2H)
    hidden_predicates = (jnp.asarray(pred_mask)[:, None, None]
                         * hidden_predicates[:, None, :])             # (Bp, 1, 2H)
    hidden_predicates = jnp.broadcast_to(hidden_predicates, y.shape)  # (Bp, T, 2H)

    feats = jnp.concatenate([y, hidden_predicates], axis=-1)          # (Bp, T, 4H)
    feats2d = feats.reshape(Bp * T, feats.shape[-1])
    # dropout: identity (eval mode)

    logits = pallas_linear(feats2d, w['lin_w'], w['lin_b'])
    logits = logits.reshape(Bp, T, -1)

    aux = dict(x_tm=x_tm, mask_tm=mask_tm, pred_pos=pred_pos, pred_mask=pred_mask)
    return logits, None, aux


# ----------------------------- numpy reference ------------------------------

def _bf16(a):
    """Round-trip through bfloat16 (matches kernel matmul operand precision)."""
    return np.asarray(jnp.asarray(np.asarray(a, np.float32),
                                  jnp.bfloat16).astype(jnp.float32))


def _np_lstm_dir(x, mask, wih, whh, b, reverse):
    T, B, _ = x.shape
    H = whh.shape[0]
    x_q, wih_q, whh_q = _bf16(x), _bf16(wih), _bf16(whh)
    h = np.zeros((B, H), np.float32)
    c = np.zeros((B, H), np.float32)
    y = np.zeros((T, B, H), np.float32)
    sig = lambda z: 1.0 / (1.0 + np.exp(-z))
    steps = range(T - 1, -1, -1) if reverse else range(T)
    for t in steps:
        g = x_q[t] @ wih_q + _bf16(h) @ whh_q + b
        i = sig(g[:, 0:H]); f = sig(g[:, H:2 * H])
        gg = np.tanh(g[:, 2 * H:3 * H]); o = sig(g[:, 3 * H:4 * H])
        c_new = f * c + i * gg
        h_new = o * np.tanh(c_new)
        m = mask[t]
        c = m * c_new + (1.0 - m) * c
        h = m * h_new + (1.0 - m) * h
        y[t] = m * h_new
    return y


# ----------------------------- main -----------------------------------------

def init_weights(P, key):
    E, H = P['bert_embedding_dim'], P['hidden_dim']
    pred_dim = P['predicates_hidden_dim']   # task_234=False -> predicates_embedding_dim
    din = E + 1 + P['pos_embedding_dim'] + P['lemmas_embedding_dim'] + pred_dim
    ks = jax.random.split(key, 12)
    r = lambda k, shape, s=0.1: np.asarray(
        jax.random.normal(k, shape, dtype=jnp.float32)) * np.float32(s)
    w = {
        'pos_emb':  r(ks[0], (P['num_pos_tags'], P['pos_embedding_dim']), 0.5),
        'lem_emb':  r(ks[1], (P['num_lemmas'], P['lemmas_embedding_dim']), 0.5),
        'pred_emb': r(ks[2], (P['num_predicates'], pred_dim), 0.5),
        'wih_f': r(ks[3], (din, 4 * H)),
        'whh_f': r(ks[4], (H, 4 * H)),
        'b_f':   r(ks[5], (1, 4 * H)),      # b_ih + b_hh pre-summed
        'wih_b': r(ks[6], (din, 4 * H)),
        'whh_b': r(ks[7], (H, 4 * H)),
        'b_b':   r(ks[8], (1, 4 * H)),
        'lin_w': r(ks[9], (4 * H, P['num_roles'])),
        'lin_b': r(ks[10], (1, P['num_roles'])),
    }
    return w, din


if __name__ == "__main__":
    P = dict(bert_embedding_dim=32, num_pos_tags=10, pos_embedding_dim=8,
             predicates_hidden_dim=16, predicates_num_layers=1, num_predicates=12,
             num_lemmas=20, lemmas_embedding_dim=8, hidden_dim=32,
             bidirectional=True, num_layers=1, dropout=0.0, num_roles=6)
    B, T = 2, 8
    predicate_null_token = 0

    key = jax.random.PRNGKey(0)
    k_w, k_sent, k_pos, k_lem = jax.random.split(key, 4)
    w, din = init_weights(P, k_w)

    sentences = np.asarray(
        jax.random.normal(k_sent, (B, T, P['bert_embedding_dim']), dtype=jnp.float32))
    lens = np.array([T, 5], dtype=np.int64)          # max(lens) == T so shapes match torch
    pos_tags = np.asarray(jax.random.randint(k_pos, (B, T), 0, P['num_pos_tags']))
    lemmas = np.asarray(jax.random.randint(k_lem, (B, T), 0, P['num_lemmas']))
    predicates = np.zeros((B, T), dtype=np.int64)
    predicates[0, 1] = 3
    predicates[0, 4] = 7
    predicates[1, 2] = 5

    logits, preds, aux = bilstm_forward(w, sentences, lens, pos_tags, predicates,
                                        lemmas, predicate_null_token)
    logits = jax.block_until_ready(logits)

    # --- pure-numpy reference of the kernelized hot path (bf16 operands) -----
    yf_r = _np_lstm_dir(aux['x_tm'], aux['mask_tm'], w['wih_f'], w['whh_f'], w['b_f'], False)
    yb_r = _np_lstm_dir(aux['x_tm'], aux['mask_tm'], w['wih_b'], w['whh_b'], w['b_b'], True)
    y_r = np.transpose(np.concatenate([yf_r, yb_r], axis=-1), (1, 0, 2))
    Bp = y_r.shape[0]
    hp_r = y_r[np.arange(Bp), aux['pred_pos']]
    hp_r = aux['pred_mask'][:, None, None] * hp_r[:, None, :] * np.ones((Bp, T, 1), np.float32)
    feats_r = np.concatenate([y_r, hp_r], axis=-1).reshape(Bp * T, -1)
    logits_r = (_bf16(feats_r) @ _bf16(w['lin_w']) + w['lin_b']).reshape(Bp, T, -1)

    np.testing.assert_allclose(np.asarray(logits), logits_r, atol=1e-2, rtol=1e-2)
    assert logits.shape == (Bp, T, P['num_roles'])
    print("KERNEL_OK")
</pallas_src>

<mosaic_0001>
module attributes {stable_mosaic.version = 11 : i64} {
  func.func @_bilstm_kernel(%arg0: i32, %arg1: memref<8x8x128xbf16, #tpu.memory_space<vmem>>, %arg2: memref<8x1xi32, #tpu.memory_space<vmem>>, %arg3: memref<128x256xbf16, #tpu.memory_space<vmem>>, %arg4: memref<32x128xbf16, #tpu.memory_space<vmem>>, %arg5: memref<32x128xbf16, #tpu.memory_space<vmem>>, %arg6: memref<1x256xf32, #tpu.memory_space<vmem>>, %arg7: memref<8x8x128xf32, #tpu.memory_space<vmem>>, %arg8: memref<8x8x256xf32, #tpu.memory_space<vmem>>, %arg9: memref<8x8x32xf32, #tpu.memory_space<vmem>>, %arg10: memref<8x8x32xf32, #tpu.memory_space<vmem>>) attributes {dimension_semantics = [#tpu.dimension_semantics<arbitrary>], iteration_bounds = array<i64: 1>, scalar_prefetch = 0 : i64, scratch_operands = 3 : i64, tpu.core_type = #tpu.core_type<tc>, window_params = [{pipeline_mode = #tpu.pipeline_mode<synchronous>, transform_indices = @transform_0, window_bounds = array<i64: 8, 8, 128>}, {pipeline_mode = #tpu.pipeline_mode<synchronous>, transform_indices = @transform_1, window_bounds = array<i64: 8, 1>}, {pipeline_mode = #tpu.pipeline_mode<synchronous>, transform_indices = @transform_2, window_bounds = array<i64: 128, 256>}, {pipeline_mode = #tpu.pipeline_mode<synchronous>, transform_indices = @transform_3, window_bounds = array<i64: 32, 128>}, {pipeline_mode = #tpu.pipeline_mode<synchronous>, transform_indices = @transform_4, window_bounds = array<i64: 32, 128>}, {pipeline_mode = #tpu.pipeline_mode<synchronous>, transform_indices = @transform_5, window_bounds = array<i64: 1, 256>}, {pipeline_mode = #tpu.pipeline_mode<synchronous>, transform_indices = @transform_6, window_bounds = array<i64: 8, 8, 128>}]} {
    %c0 = arith.constant 0 : index
    %c0_0 = arith.constant 0 : index
    %c0_1 = arith.constant 0 : index
    %0 = vector.load %arg1[%c0, %c0_0, %c0_1] : memref<8x8x128xbf16, #tpu.memory_space<vmem>>, vector<8x8x128xbf16>
    %1 = vector.shape_cast %0 : vector<8x8x128xbf16> to vector<64x128xbf16>
    %c0_2 = arith.constant 0 : index
    %c0_3 = arith.constant 0 : index
    %2 = vector.load %arg3[%c0_2, %c0_3] : memref<128x256xbf16, #tpu.memory_space<vmem>>, vector<128x256xbf16>
    %cst = arith.constant dense<0.000000e+00> : vector<64x256xf32>
    %3 = tpu.matmul %1, %2, %cst {dimension_numbers = #tpu.dot_dimension_numbers<[1], [0], [0], [1], [0, 0, 1, 1], [], []>} : vector<64x128xbf16>, vector<128x256xbf16>, vector<64x256xf32> -> vector<64x256xf32>
    %c0_4 = arith.constant 0 : index
    %c0_5 = arith.constant 0 : index
    %4 = vector.load %arg6[%c0_4, %c0_5] : memref<1x256xf32, #tpu.memory_space<vmem>>, vector<1x256xf32>
    %5 = vector.broadcast %4 : vector<1x256xf32> to vector<64x256xf32>
    %6 = arith.addf %3, %5 : vector<64x256xf32>
    %7 = vector.shape_cast %6 : vector<64x256xf32> to vector<8x8x256xf32>
    %c0_6 = arith.constant 0 : index
    %c0_7 = arith.constant 0 : index
    %c0_8 = arith.constant 0 : index
    %8 = vector.load %arg8[%c0_6, %c0_7, %c0_8] : memref<8x8x256xf32, #tpu.memory_space<vmem>>, vector<8x8x256xf32>
    tpu.vector_store %arg8[%c0_6, %c0_7, %c0_8], %7 {strides = array<i32>} : memref<8x8x256xf32, #tpu.memory_space<vmem>>, vector<8x8x256xf32>,
    %c0_9 = arith.constant 0 : index
    %c0_10 = arith.constant 0 : index
    %9 = vector.load %arg2[%c0_9, %c0_10] : memref<8x1xi32, #tpu.memory_space<vmem>>, vector<8x1xi32>
    %c0_11 = arith.constant 0 : index
    %c0_12 = arith.constant 0 : index
    %10 = vector.load %arg4[%c0_11, %c0_12] : memref<32x128xbf16, #tpu.memory_space<vmem>>, vector<32x128xbf16>
    %c0_13 = arith.constant 0 : index
    %c0_14 = arith.constant 0 : index
    %11 = vector.load %arg5[%c0_13, %c0_14] : memref<32x128xbf16, #tpu.memory_space<vmem>>, vector<32x128xbf16>
    %cst_15 = arith.constant 0.000000e+00 : f32
    %12 = vector.broadcast %cst_15 : f32 to vector<8x32xf32>
    %c0_i32 = arith.constant 0 : i32
    %c7_i32 = arith.constant 7 : i32
    %13 = arith.subi %c7_i32, %c0_i32 : i32
    %14 = arith.index_cast %c0_i32 : i32 to index
    %c0_16 = arith.constant 0 : index
    %c0_17 = arith.constant 0 : index
    %15 = vector.load %arg8[%14, %c0_16, %c0_17] : memref<8x8x256xf32, #tpu.memory_space<vmem>>, vector<1x8x256xf32>
    %16 = vector.shape_cast %15 : vector<1x8x256xf32> to vector<8x256xf32>
    %17 = arith.index_cast %13 : i32 to index
    %c0_18 = arith.constant 0 : index
    %c0_19 = arith.constant 0 : index
    %18 = vector.load %arg8[%17, %c0_18, %c0_19] : memref<8x8x256xf32, #tpu.memory_space<vmem>>, vector<1x8x256xf32>
    %19 = vector.shape_cast %18 : vector<1x8x256xf32> to vector<8x256xf32>
    %20 = vector.broadcast %c0_i32 : i32 to vector<8x1xi32>
    %21 = arith.cmpi sgt, %9, %20 : vector<8x1xi32>
    %22 = vector.broadcast %13 : i32 to vector<8x1xi32>
    %23 = arith.cmpi sgt, %9, %22 : vector<8x1xi32>
    %24 = vector.extract_strided_slice %16 {offsets = [0, 0], sizes = [8, 128], strides = [1, 1]} : vector<8x256xf32> to vector<8x128xf32>
    %25 = arith.truncf %12 : vector<8x32xf32> to vector<8x32xbf16>
    %cst_20 = arith.constant dense<0.000000e+00> : vector<8x128xf32>
    %26 = tpu.matmul %25, %10, %cst_20 {dimension_numbers = #tpu.dot_dimension_numbers<[1], [0], [0], [1], [0, 0, 1, 1], [], []>} : vector<8x32xbf16>, vector<32x128xbf16>, vector<8x128xf32> -> vector<8x128xf32>
    %27 = arith.addf %24, %26 : vector<8x128xf32>
    %28 = arith.negf %27 : vector<8x128xf32>
    %29 = math.exp %28 : vector<8x128xf32>
    %cst_21 = arith.constant 1.000000e+00 : f32
    %30 = vector.broadcast %cst_21 : f32 to vector<8x128xf32>
    %31 = arith.addf %30, %29 : vector<8x128xf32>
    %32 = arith.divf %30, %31 : vector<8x128xf32>
    %33 = math.tanh %27 : vector<8x128xf32>
    %34 = vector.extract_strided_slice %32 {offsets = [0, 0], sizes = [8, 32], strides = [1, 1]} : vector<8x128xf32> to vector<8x32xf32>
    %35 = vector.extract_strided_slice %32 {offsets = [0, 32], sizes = [8, 32], strides = [1, 1]} : vector<8x128xf32> to vector<8x32xf32>
    %36 = vector.extract_strided_slice %33 {offsets = [0, 64], sizes = [8, 32], strides = [1, 1]} : vector<8x128xf32> to vector<8x32xf32>
    %37 = vector.extract_strided_slice %32 {offsets = [0, 96], sizes = [8, 32], strides = [1, 1]} : vector<8x128xf32> to vector<8x32xf32>
    %38 = arith.mulf %35, %12 : vector<8x32xf32>
    %39 = arith.mulf %34, %36 : vector<8x32xf32>
    %40 = arith.addf %38, %39 : vector<8x32xf32>
    %41 = math.tanh %40 : vector<8x32xf32>
    %42 = arith.mulf %37, %41 : vector<8x32xf32>
    %43 = vector.shape_cast %21 : vector<8x1xi1> to vector<8x1xi1>
    %44 = vector.broadcast %43 : vector<8x1xi1> to vector<8x32xi1>
    %45 = arith.select %44, %40, %12 : vector<8x32xi1>, vector<8x32xf32>
    %46 = vector.shape_cast %21 : vector<8x1xi1> to vector<8x1xi1>
    %47 = vector.broadcast %46 : vector<8x1xi1> to vector<8x32xi1>
    %48 = arith.select %47, %42, %12 : vector<8x32xi1>, vector<8x32xf32>
    %cst_22 = arith.constant 0.000000e+00 : f32
    %49 = vector.shape_cast %21 : vector<8x1xi1> to vector<8x1xi1>
    %50 = vector.broadcast %49 : vector<8x1xi1> to vector<8x32xi1>
    %51 = vector.broadcast %cst_22 : f32 to vector<8x32xf32>
    %52 = arith.select %50, %42, %51 : vector<8x32xi1>, vector<8x32xf32>
    %53 = vector.extract_strided_slice %19 {offsets = [0, 128], sizes = [8, 128], strides = [1, 1]} : vector<8x256xf32> to vector<8x128xf32>
    %54 = arith.truncf %12 : vector<8x32xf32> to vector<8x32xbf16>
    %cst_23 = arith.constant dense<0.000000e+00> : vector<8x128xf32>
    %55 = tpu.matmul %54, %11, %cst_23 {dimension_numbers = #tpu.dot_dimension_numbers<[1], [0], [0], [1], [0, 0, 1, 1], [], []>} : vector<8x32xbf16>, vector<32x128xbf16>, vector<8x128xf32> -> vector<8x128xf32>
    %56 = arith.addf %53, %55 : vector<8x128xf32>
    %57 = arith.negf %56 : vector<8x128xf32>
    %58 = math.exp %57 : vector<8x128xf32>
    %cst_24 = arith.constant 1.000000e+00 : f32
    %59 = vector.broadcast %cst_24 : f32 to vector<8x128xf32>
    %60 = arith.addf %59, %58 : vector<8x128xf32>
    %61 = arith.divf %59, %60 : vector<8x128xf32>
    %62 = math.tanh %56 : vector<8x128xf32>
    %63 = vector.extract_strided_slice %61 {offsets = [0, 0], sizes = [8, 32], strides = [1, 1]} : vector<8x128xf32> to vector<8x32xf32>
    %64 = vector.extract_strided_slice %61 {offsets = [0, 32], sizes = [8, 32], strides = [1, 1]} : vector<8x128xf32> to vector<8x32xf32>
    %65 = vector.extract_strided_slice %62 {offsets = [0, 64], sizes = [8, 32], strides = [1, 1]} : vector<8x128xf32> to vector<8x32xf32>
    %66 = vector.extract_strided_slice %61 {offsets = [0, 96], sizes = [8, 32], strides = [1, 1]} : vector<8x128xf32> to vector<8x32xf32>
    %67 = arith.mulf %64, %12 : vector<8x32xf32>
    %68 = arith.mulf %63, %65 : vector<8x32xf32>
    %69 = arith.addf %67, %68 : vector<8x32xf32>
    %70 = math.tanh %69 : vector<8x32xf32>
    %71 = arith.mulf %66, %70 : vector<8x32xf32>
    %72 = vector.shape_cast %23 : vector<8x1xi1> to vector<8x1xi1>
    %73 = vector.broadcast %72 : vector<8x1xi1> to vector<8x32xi1>
    %74 = arith.select %73, %69, %12 : vector<8x32xi1>, vector<8x32xf32>
    %75 = vector.shape_cast %23 : vector<8x1xi1> to vector<8x1xi1>
    %76 = vector.broadcast %75 : vector<8x1xi1> to vector<8x32xi1>
    %77 = arith.select %76, %71, %12 : vector<8x32xi1>, vector<8x32xf32>
    %cst_25 = arith.constant 0.000000e+00 : f32
    %78 = vector.shape_cast %23 : vector<8x1xi1> to vector<8x1xi1>
    %79 = vector.broadcast %78 : vector<8x1xi1> to vector<8x32xi1>
    %80 = vector.broadcast %cst_25 : f32 to vector<8x32xf32>
    %81 = arith.select %79, %71, %80 : vector<8x32xi1>, vector<8x32xf32>
    %82 = arith.index_cast %c0_i32 : i32 to index
    %c0_26 = arith.constant 0 : index
    %c0_27 = arith.constant 0 : index
    %83 = vector.load %arg9[%82, %c0_26, %c0_27] : memref<8x8x32xf32, #tpu.memory_space<vmem>>, vector<1x8x32xf32>
    %84 = vector.shape_cast %83 : vector<1x8x32xf32> to vector<8x32xf32>
    %85 = vector.shape_cast %52 : vector<8x32xf32> to vector<1x8x32xf32>
    tpu.vector_store %arg9[%82, %c0_26, %c0_27], %85 {strides = array<i32>} : memref<8x8x32xf32, #tpu.memory_space<vmem>>, vector<1x8x32xf32>,
    %86 = arith.index_cast %13 : i32 to index
    %c0_28 = arith.constant 0 : index
    %c0_29 = arith.constant 0 : index
    %87 = vector.load %arg10[%86, %c0_28, %c0_29] : memref<8x8x32xf32, #tpu.memory_space<vmem>>, vector<1x8x32xf32>
    %88 = vector.shape_cast %87 : vector<1x8x32xf32> to vector<8x32xf32>
    %89 = vector.shape_cast %81 : vector<8x32xf32> to vector<1x8x32xf32>
    tpu.vector_store %arg10[%86, %c0_28, %c0_29], %89 {strides = array<i32>} : memref<8x8x32xf32, #tpu.memory_space<vmem>>, vector<1x8x32xf32>,
    %c1_i32 = arith.constant 1 : i32
    %c7_i32_30 = arith.constant 7 : i32
    %90 = arith.subi %c7_i32_30, %c1_i32 : i32
    %91 = arith.index_cast %c1_i32 : i32 to index
    %c0_31 = arith.constant 0 : index
    %c0_32 = arith.constant 0 : index
    %92 = vector.load %arg8[%91, %c0_31, %c0_32] : memref<8x8x256xf32, #tpu.memory_space<vmem>>, vector<1x8x256xf32>
    %93 = vector.shape_cast %92 : vector<1x8x256xf32> to vector<8x256xf32>
    %94 = arith.index_cast %90 : i32 to index
    %c0_33 = arith.constant 0 : index
    %c0_34 = arith.constant 0 : index
    %95 = vector.load %arg8[%94, %c0_33, %c0_34] : memref<8x8x256xf32, #tpu.memory_space<vmem>>, vector<1x8x256xf32>
    %96 = vector.shape_cast %95 : vector<1x8x256xf32> to vector<8x256xf32>
    %97 = vector.broadcast %c1_i32 : i32 to vector<8x1xi32>
    %98 = arith.cmpi sgt, %9, %97 : vector<8x1xi32>
    %99 = vector.broadcast %90 : i32 to vector<8x1xi32>
    %100 = arith.cmpi sgt, %9, %99 : vector<8x1xi32>
    %101 = vector.extract_strided_slice %93 {offsets = [0, 0], sizes = [8, 128], strides = [1, 1]} : vector<8x256xf32> to vector<8x128xf32>
    %102 = arith.truncf %48 : vector<8x32xf32> to vector<8x32xbf16>
    %cst_35 = arith.constant dense<0.000000e+00> : vector<8x128xf32>
    %103 = tpu.matmul %102, %10, %cst_35 {dimension_numbers = #tpu.dot_dimension_numbers<[1], [0], [0], [1], [0, 0, 1, 1], [], []>} : vector<8x32xbf16>, vector<32x128xbf16>, vector<8x128xf32> -> vector<8x128xf32>
    %104 = arith.addf %101, %103 : vector<8x128xf32>
    %105 = arith.negf %104 : vector<8x128xf32>
    %106 = math.exp %105 : vector<8x128xf32>
    %cst_36 = arith.constant 1.000000e+00 : f32
    %107 = vector.broadcast %cst_36 : f32 to vector<8x128xf32>
    %108 = arith.addf %107, %106 : vector<8x128xf32>
    %109 = arith.divf %107, %108 : vector<8x128xf32>
    %110 = math.tanh %104 : vector<8x128xf32>
    %111 = vector.extract_strided_slice %109 {offsets = [0, 0], sizes = [8, 32], strides = [1, 1]} : vector<8x128xf32> to vector<8x32xf32>
    %112 = vector.extract_strided_slice %109 {offsets = [0, 32], sizes = [8, 32], strides = [1, 1]} : vector<8x128xf32> to vector<8x32xf32>
    %113 = vector.extract_strided_slice %110 {offsets = [0, 64], sizes = [8, 32], strides = [1, 1]} : vector<8x128xf32> to vector<8x32xf32>
    %114 = vector.extract_strided_slice %109 {offsets = [0, 96], sizes = [8, 32], strides = [1, 1]} : vector<8x128xf32> to vector<8x32xf32>
    %115 = arith.mulf %112, %45 : vector<8x32xf32>
    %116 = arith.mulf %111, %113 : vector<8x32xf32>
    %117 = arith.addf %115, %116 : vector<8x32xf32>
    %118 = math.tanh %117 : vector<8x32xf32>
    %119 = arith.mulf %114, %118 : vector<8x32xf32>
    %120 = vector.shape_cast %98 : vector<8x1xi1> to vector<8x1xi1>
    %121 = vector.broadcast %120 : vector<8x1xi1> to vector<8x32xi1>
    %122 = arith.select %121, %117, %45 : vector<8x32xi1>, vector<8x32xf32>
    %123 = vector.shape_cast %98 : vector<8x1xi1> to vector<8x1xi1>
    %124 = vector.broadcast %123 : vector<8x1xi1> to vector<8x32xi1>
    %125 = arith.select %124, %119, %48 : vector<8x32xi1>, vector<8x32xf32>
    %cst_37 = arith.constant 0.000000e+00 : f32
    %126 = vector.shape_cast %98 : vector<8x1xi1> to vector<8x1xi1>
    %127 = vector.broadcast %126 : vector<8x1xi1> to vector<8x32xi1>
    %128 = vector.broadcast %cst_37 : f32 to vector<8x32xf32>
    %129 = arith.select %127, %119, %128 : vector<8x32xi1>, vector<8x32xf32>
    %130 = vector.extract_strided_slice %96 {offsets = [0, 128], sizes = [8, 128], strides = [1, 1]} : vector<8x256xf32> to vector<8x128xf32>
    %131 = arith.truncf %77 : vector<8x32xf32> to vector<8x32xbf16>
    %cst_38 = arith.constant dense<0.000000e+00> : vector<8x128xf32>
    %132 = tpu.matmul %131, %11, %cst_38 {dimension_numbers = #tpu.dot_dimension_numbers<[1], [0], [0], [1], [0, 0, 1, 1], [], []>} : vector<8x32xbf16>, vector<32x128xbf16>, vector<8x128xf32> -> vector<8x128xf32>
    %133 = arith.addf %130, %132 : vector<8x128xf32>
    %134 = arith.negf %133 : vector<8x128xf32>
    %135 = math.exp %134 : vector<8x128xf32>
    %cst_39 = arith.constant 1.000000e+00 : f32
    %136 = vector.broadcast %cst_39 : f32 to vector<8x128xf32>
    %137 = arith.addf %136, %135 : vector<8x128xf32>
    %138 = arith.divf %136, %137 : vector<8x128xf32>
    %139 = math.tanh %133 : vector<8x128xf32>
    %140 = vector.extract_strided_slice %138 {offsets = [0, 0], sizes = [8, 32], strides = [1, 1]} : vector<8x128xf32> to vector<8x32xf32>
    %141 = vector.extract_strided_slice %138 {offsets = [0, 32], sizes = [8, 32], strides = [1, 1]} : vector<8x128xf32> to vector<8x32xf32>
    %142 = vector.extract_strided_slice %139 {offsets = [0, 64], sizes = [8, 32], strides = [1, 1]} : vector<8x128xf32> to vector<8x32xf32>
    %143 = vector.extract_strided_slice %138 {offsets = [0, 96], sizes = [8, 32], strides = [1, 1]} : vector<8x128xf32> to vector<8x32xf32>
    %144 = arith.mulf %141, %74 : vector<8x32xf32>
    %145 = arith.mulf %140, %142 : vector<8x32xf32>
    %146 = arith.addf %144, %145 : vector<8x32xf32>
    %147 = math.tanh %146 : vector<8x32xf32>
    %148 = arith.mulf %143, %147 : vector<8x32xf32>
    %149 = vector.shape_cast %100 : vector<8x1xi1> to vector<8x1xi1>
    %150 = vector.broadcast %149 : vector<8x1xi1> to vector<8x32xi1>
    %151 = arith.select %150, %146, %74 : vector<8x32xi1>, vector<8x32xf32>
    %152 = vector.shape_cast %100 : vector<8x1xi1> to vector<8x1xi1>
    %153 = vector.broadcast %152 : vector<8x1xi1> to vector<8x32xi1>
    %154 = arith.select %153, %148, %77 : vector<8x32xi1>, vector<8x32xf32>
    %cst_40 = arith.constant 0.000000e+00 : f32
    %155 = vector.shape_cast %100 : vector<8x1xi1> to vector<8x1xi1>
    %156 = vector.broadcast %155 : vector<8x1xi1> to vector<8x32xi1>
    %157 = vector.broadcast %cst_40 : f32 to vector<8x32xf32>
    %158 = arith.select %156, %148, %157 : vector<8x32xi1>, vector<8x32xf32>
    %159 = arith.index_cast %c1_i32 : i32 to index
    %c0_41 = arith.constant 0 : index
    %c0_42 = arith.constant 0 : index
    %160 = vector.load %arg9[%159, %c0_41, %c0_42] : memref<8x8x32xf32, #tpu.memory_space<vmem>>, vector<1x8x32xf32>
    %161 = vector.shape_cast %160 : vector<1x8x32xf32> to vector<8x32xf32>
    %162 = vector.shape_cast %129 : vector<8x32xf32> to vector<1x8x32xf32>
    tpu.vector_store %arg9[%159, %c0_41, %c0_42], %162 {strides = array<i32>} : memref<8x8x32xf32, #tpu.memory_space<vmem>>, vector<1x8x32xf32>,
    %163 = arith.index_cast %90 : i32 to index
    %c0_43 = arith.constant 0 : index
    %c0_44 = arith.constant 0 : index
    %164 = vector.load %arg10[%163, %c0_43, %c0_44] : memref<8x8x32xf32, #tpu.memory_space<vmem>>, vector<1x8x32xf32>
    %165 = vector.shape_cast %164 : vector<1x8x32xf32> to vector<8x32xf32>
    %166 = vector.shape_cast %158 : vector<8x32xf32> to vector<1x8x32xf32>
    tpu.vector_store %arg10[%163, %c0_43, %c0_44], %166 {strides = array<i32>} : memref<8x8x32xf32, #tpu.memory_space<vmem>>, vector<1x8x32xf32>,
    %c2_i32 = arith.constant 2 : i32
    %c7_i32_45 = arith.constant 7 : i32
    %167 = arith.subi %c7_i32_45, %c2_i32 : i32
    %168 = arith.index_cast %c2_i32 : i32 to index
    %c0_46 = arith.constant 0 : index
    %c0_47 = arith.constant 0 : index
    %169 = vector.load %arg8[%168, %c0_46, %c0_47] : memref<8x8x256xf32, #tpu.memory_space<vmem>>, vector<1x8x256xf32>
    %170 = vector.shape_cast %169 : vector<1x8x256xf32> to vector<8x256xf32>
    %171 = arith.index_cast %167 : i32 to index
    %c0_48 = arith.constant 0 : index
    %c0_49 = arith.constant 0 : index
    %172 = vector.load %arg8[%171, %c0_48, %c0_49] : memref<8x8x256xf32, #tpu.memory_space<vmem>>, vector<1x8x256xf32>
    %173 = vector.shape_cast %172 : vector<1x8x256xf32> to vector<8x256xf32>
    %174 = vector.broadcast %c2_i32 : i32 to vector<8x1xi32>
    %175 = arith.cmpi sgt, %9, %174 : vector<8x1xi32>
    %176 = vector.broadcast %167 : i32 to vector<8x1xi32>
    %177 = arith.cmpi sgt, %9, %176 : vector<8x1xi32>
    %178 = vector.extract_strided_slice %170 {offsets = [0, 0], sizes = [8, 128], strides = [1, 1]} : vector<8x256xf32> to vector<8x128xf32>
    %179 = arith.truncf %125 : vector<8x32xf32> to vector<8x32xbf16>
    %cst_50 = arith.constant dense<0.000000e+00> : vector<8x128xf32>
    %180 = tpu.matmul %179, %10, %cst_50 {dimension_numbers = #tpu.dot_dimension_numbers<[1], [0], [0], [1], [0, 0, 1, 1], [], []>} : vector<8x32xbf16>, vector<32x128xbf16>, vector<8x128xf32> -> vector<8x128xf32>
    %181 = arith.addf %178, %180 : vector<8x128xf32>
    %182 = arith.negf %181 : vector<8x128xf32>
    %183 = math.exp %182 : vector<8x128xf32>
    %cst_51 = arith.constant 1.000000e+00 : f32
    %184 = vector.broadcast %cst_51 : f32 to vector<8x128xf32>
    %185 = arith.addf %184, %183 : vector<8x128xf32>
    %186 = arith.divf %184, %185 : vector<8x128xf32>
    %187 = math.tanh %181 : vector<8x128xf32>
    %188 = vector.extract_strided_slice %186 {offsets = [0, 0], sizes = [8, 32], strides = [1, 1]} : vector<8x128xf32> to vector<8x32xf32>
    %189 = vector.extract_strided_slice %186 {offsets = [0, 32], sizes = [8, 32], strides = [1, 1]} : vector<8x128xf32> to vector<8x32xf32>
    %190 = vector.extract_strided_slice %187 {offsets = [0, 64], sizes = [8, 32], strides = [1, 1]} : vector<8x128xf32> to vector<8x32xf32>
    %191 = vector.extract_strided_slice %186 {offsets = [0, 96], sizes = [8, 32], strides = [1, 1]} : vector<8x128xf32> to vector<8x32xf32>
    %192 = arith.mulf %189, %122 : vector<8x32xf32>
    %193 = arith.mulf %188, %190 : vector<8x32xf32>
    %194 = arith.addf %192, %193 : vector<8x32xf32>
    %195 = math.tanh %194 : vector<8x32xf32>
    %196 = arith.mulf %191, %195 : vector<8x32xf32>
    %197 = vector.shape_cast %175 : vector<8x1xi1> to vector<8x1xi1>
    %198 = vector.broadcast %197 : vector<8x1xi1> to vector<8x32xi1>
    %199 = arith.select %198, %194, %122 : vector<8x32xi1>, vector<8x32xf32>
    %200 = vector.shape_cast %175 : vector<8x1xi1> to vector<8x1xi1>
    %201 = vector.broadcast %200 : vector<8x1xi1> to vector<8x32xi1>
    %202 = arith.select %201, %196, %125 : vector<8x32xi1>, vector<8x32xf32>
    %cst_52 = arith.constant 0.000000e+00 : f32
    %203 = vector.shape_cast %175 : vector<8x1xi1> to vector<8x1xi1>
    %204 = vector.broadcast %203 : vector<8x1xi1> to vector<8x32xi1>
    %205 = vector.broadcast %cst_52 : f32 to vector<8x32xf32>
    %206 = arith.select %204, %196, %205 : vector<8x32xi1>, vector<8x32xf32>
    %207 = vector.extract_strided_slice %173 {offsets = [0, 128], sizes = [8, 128], strides = [1, 1]} : vector<8x256xf32> to vector<8x128xf32>
    %208 = arith.truncf %154 : vector<8x32xf32> to vector<8x32xbf16>
    %cst_53 = arith.constant dense<0.000000e+00> : vector<8x128xf32>
    %209 = tpu.matmul %208, %11, %cst_53 {dimension_numbers = #tpu.dot_dimension_numbers<[1], [0], [0], [1], [0, 0, 1, 1], [], []>} : vector<8x32xbf16>, vector<32x128xbf16>, vector<8x128xf32> -> vector<8x128xf32>
    %210 = arith.addf %207, %209 : vector<8x128xf32>
    %211 = arith.negf %210 : vector<8x128xf32>
    %212 = math.exp %211 : vector<8x128xf32>
    %cst_54 = arith.constant 1.000000e+00 : f32
    %213 = vector.broadcast %cst_54 : f32 to vector<8x128xf32>
    %214 = arith.addf %213, %212 : vector<8x128xf32>
    %215 = arith.divf %213, %214 : vector<8x128xf32>
    %216 = math.tanh %210 : vector<8x128xf32>
    %217 = vector.extract_strided_slice %215 {offsets = [0, 0], sizes = [8, 32], strides = [1, 1]} : vector<8x128xf32> to vector<8x32xf32>
    %218 = vector.extract_strided_slice %215 {offsets = [0, 32], sizes = [8, 32], strides = [1, 1]} : vector<8x128xf32> to vector<8x32xf32>
    %219 = vector.extract_strided_slice %216 {offsets = [0, 64], sizes = [8, 32], strides = [1, 1]} : vector<8x128xf32> to vector<8x32xf32>
    %220 = vector.extract_strided_slice %215 {offsets = [0, 96], sizes = [8, 32], strides = [1, 1]} : vector<8x128xf32> to vector<8x32xf32>
    %221 = arith.mulf %218, %151 : vector<8x32xf32>
    %222 = arith.mulf %217, %219 : vector<8x32xf32>
    %223 = arith.addf %221, %222 : vector<8x32xf32>
    %224 = math.tanh %223 : vector<8x32xf32>
    %225 = arith.mulf %220, %224 : vector<8x32xf32>
    %226 = vector.shape_cast %177 : vector<8x1xi1> to vector<8x1xi1>
    %227 = vector.broadcast %226 : vector<8x1xi1> to vector<8x32xi1>
    %228 = arith.select %227, %223, %151 : vector<8x32xi1>, vector<8x32xf32>
    %229 = vector.shape_cast %177 : vector<8x1xi1> to vector<8x1xi1>
    %230 = vector.broadcast %229 : vector<8x1xi1> to vector<8x32xi1>
    %231 = arith.select %230, %225, %154 : vector<8x32xi1>, vector<8x32xf32>
    %cst_55 = arith.constant 0.000000e+00 : f32
    %232 = vector.shape_cast %177 : vector<8x1xi1> to vector<8x1xi1>
    %233 = vector.broadcast %232 : vector<8x1xi1> to vector<8x32xi1>
    %234 = vector.broadcast %cst_55 : f32 to vector<8x32xf32>
    %235 = arith.select %233, %225, %234 : vector<8x32xi1>, vector<8x32xf32>
    %236 = arith.index_cast %c2_i32 : i32 to index
    %c0_56 = arith.constant 0 : index
    %c0_57 = arith.constant 0 : index
    %237 = vector.load %arg9[%236, %c0_56, %c0_57] : memref<8x8x32xf32, #tpu.memory_space<vmem>>, vector<1x8x32xf32>
    %238 = vector.shape_cast %237 : vector<1x8x32xf32> to vector<8x32xf32>
    %239 = vector.shape_cast %206 : vector<8x32xf32> to vector<1x8x32xf32>
    tpu.vector_store %arg9[%236, %c0_56, %c0_57], %239 {strides = array<i32>} : memref<8x8x32xf32, #tpu.memory_space<vmem>>, vector<1x8x32xf32>,
    %240 = arith.index_cast %167 : i32 to index
    %c0_58 = arith.constant 0 : index
    %c0_59 = arith.constant 0 : index
    %241 = vector.load %arg10[%240, %c0_58, %c0_59] : memref<8x8x32xf32, #tpu.memory_space<vmem>>, vector<1x8x32xf32>
    %242 = vector.shape_cast %241 : vector<1x8x32xf32> to vector<8x32xf32>
    %243 = vector.shape_cast %235 : vector<8x32xf32> to vector<1x8x32xf32>
    tpu.vector_store %arg10[%240, %c0_58, %c0_59], %243 {strides = array<i32>} : memref<8x8x32xf32, #tpu.memory_space<vmem>>, vector<1x8x32xf32>,
    %c3_i32 = arith.constant 3 : i32
    %c7_i32_60 = arith.constant 7 : i32
    %244 = arith.subi %c7_i32_60, %c3_i32 : i32
    %245 = arith.index_cast %c3_i32 : i32 to index
    %c0_61 = arith.constant 0 : index
    %c0_62 = arith.constant 0 : index
    %246 = vector.load %arg8[%245, %c0_61, %c0_62] : memref<8x8x256xf32, #tpu.memory_space<vmem>>, vector<1x8x256xf32>
    %247 = vector.shape_cast %246 : vector<1x8x256xf32> to vector<8x256xf32>
    %248 = arith.index_cast %244 : i32 to index
    %c0_63 = arith.constant 0 : index
    %c0_64 = arith.constant 0 : index
    %249 = vector.load %arg8[%248, %c0_63, %c0_64] : memref<8x8x256xf32, #tpu.memory_space<vmem>>, vector<1x8x256xf32>
    %250 = vector.shape_cast %249 : vector<1x8x256xf32> to vector<8x256xf32>
    %251 = vector.broadcast %c3_i32 : i32 to vector<8x1xi32>
    %252 = arith.cmpi sgt, %9, %251 : vector<8x1xi32>
    %253 = vector.broadcast %244 : i32 to vector<8x1xi32>
    %254 = arith.cmpi sgt, %9, %253 : vector<8x1xi32>
    %255 = vector.extract_strided_slice %247 {offsets = [0, 0], sizes = [8, 128], strides = [1, 1]} : vector<8x256xf32> to vector<8x128xf32>
    %256 = arith.truncf %202 : vector<8x32xf32> to vector<8x32xbf16>
    %cst_65 = arith.constant dense<0.000000e+00> : vector<8x128xf32>
    %257 = tpu.matmul %256, %10, %cst_65 {dimension_numbers = #tpu.dot_dimension_numbers<[1], [0], [0], [1], [0, 0, 1, 1], [], []>} : vector<8x32xbf16>, vector<32x128xbf16>, vector<8x128xf32> -> vector<8x128xf32>
    %258 = arith.addf %255, %257 : vector<8x128xf32>
    %259 = arith.negf %258 : vector<8x128xf32>
    %260 = math.exp %259 : vector<8x128xf32>
    %cst_66 = arith.constant 1.000000e+00 : f32
    %261 = vector.broadcast %cst_66 : f32 to vector<8x128xf32>
    %262 = arith.addf %261, %260 : vector<8x128xf32>
    %263 = arith.divf %261, %262 : vector<8x128xf32>
    %264 = math.tanh %258 : vector<8x128xf32>
    %265 = vector.extract_strided_slice %263 {offsets = [0, 0], sizes = [8, 32], strides = [1, 1]} : vector<8x128xf32> to vector<8x32xf32>
    %266 = vector.extract_strided_slice %263 {offsets = [0, 32], sizes = [8, 32], strides = [1, 1]} : vector<8x128xf32> to vector<8x32xf32>
    %267 = vector.extract_strided_slice %264 {offsets = [0, 64], sizes = [8, 32], strides = [1, 1]} : vector<8x128xf32> to vector<8x32xf32>
    %268 = vector.extract_strided_slice %263 {offsets = [0, 96], sizes = [8, 32], strides = [1, 1]} : vector<8x128xf32> to vector<8x32xf32>
    %269 = arith.mulf %266, %199 : vector<8x32xf32>
    %270 = arith.mulf %265, %267 : vector<8x32xf32>
    %271 = arith.addf %269, %270 : vector<8x32xf32>
    %272 = math.tanh %271 : vector<8x32xf32>
    %273 = arith.mulf %268, %272 : vector<8x32xf32>
    %274 = vector.shape_cast %252 : vector<8x1xi1> to vector<8x1xi1>
    %275 = vector.broadcast %274 : vector<8x1xi1> to vector<8x32xi1>
    %276 = arith.select %275, %271, %199 : vector<8x32xi1>, vector<8x32xf32>
    %277 = vector.shape_cast %252 : vector<8x1xi1> to vector<8x1xi1>
    %278 = vector.broadcast %277 : vector<8x1xi1> to vector<8x32xi1>
    %279 = arith.select %278, %273, %202 : vector<8x32xi1>, vector<8x32xf32>
    %cst_67 = arith.constant 0.000000e+00 : f32
    %280 = vector.shape_cast %252 : vector<8x1xi1> to vector<8x1xi1>
    %281 = vector.broadcast %280 : vector<8x1xi1> to vector<8x32xi1>
    %282 = vector.broadcast %cst_67 : f32 to vector<8x32xf32>
    %283 = arith.select %281, %273, %282 : vector<8x32xi1>, vector<8x32xf32>
    %284 = vector.extract_strided_slice %250 {offsets = [0, 128], sizes = [8, 128], strides = [1, 1]} : vector<8x256xf32> to vector<8x128xf32>
    %285 = arith.truncf %231 : vector<8x32xf32> to vector<8x32xbf16>
    %cst_68 = arith.constant dense<0.000000e+00> : vector<8x128xf32>
    %286 = tpu.matmul %285, %11, %cst_68 {dimension_numbers = #tpu.dot_dimension_numbers<[1], [0], [0], [1], [0, 0, 1, 1], [], []>} : vector<8x32xbf16>, vector<32x128xbf16>, vector<8x128xf32> -> vector<8x128xf32>
    %287 = arith.addf %284, %286 : vector<8x128xf32>
    %288 = arith.negf %287 : vector<8x128xf32>
    %289 = math.exp %288 : vector<8x128xf32>
    %cst_69 = arith.constant 1.000000e+00 : f32
    %290 = vector.broadcast %cst_69 : f32 to vector<8x128xf32>
    %291 = arith.addf %290, %289 : vector<8x128xf32>
    %292 = arith.divf %290, %291 : vector<8x128xf32>
    %293 = math.tanh %287 : vector<8x128xf32>
    %294 = vector.extract_strided_slice %292 {offsets = [0, 0], sizes = [8, 32], strides = [1, 1]} : vector<8x128xf32> to vector<8x32xf32>
    %295 = vector.extract_strided_slice %292 {offsets = [0, 32], sizes = [8, 32], strides = [1, 1]} : vector<8x128xf32> to vector<8x32xf32>
    %296 = vector.extract_strided_slice %293 {offsets = [0, 64], sizes = [8, 32], strides = [1, 1]} : vector<8x128xf32> to vector<8x32xf32>
    %297 = vector.extract_strided_slice %292 {offsets = [0, 96], sizes = [8, 32], strides = [1, 1]} : vector<8x128xf32> to vector<8x32xf32>
    %298 = arith.mulf %295, %228 : vector<8x32xf32>
    %299 = arith.mulf %294, %296 : vector<8x32xf32>
    %300 = arith.addf %298, %299 : vector<8x32xf32>
    %301 = math.tanh %300 : vector<8x32xf32>
    %302 = arith.mulf %297, %301 : vector<8x32xf32>
    %303 = vector.shape_cast %254 : vector<8x1xi1> to vector<8x1xi1>
    %304 = vector.broadcast %303 : vector<8x1xi1> to vector<8x32xi1>
    %305 = arith.select %304, %300, %228 : vector<8x32xi1>, vector<8x32xf32>
    %306 = vector.shape_cast %254 : vector<8x1xi1> to vector<8x1xi1>
    %307 = vector.broadcast %306 : vector<8x1xi1> to vector<8x32xi1>
    %308 = arith.select %307, %302, %231 : vector<8x32xi1>, vector<8x32xf32>
    %cst_70 = arith.constant 0.000000e+00 : f32
    %309 = vector.shape_cast %254 : vector<8x1xi1> to vector<8x1xi1>
    %310 = vector.broadcast %309 : vector<8x1xi1> to vector<8x32xi1>
    %311 = vector.broadcast %cst_70 : f32 to vector<8x32xf32>
    %312 = arith.select %310, %302, %311 : vector<8x32xi1>, vector<8x32xf32>
    %313 = arith.index_cast %c3_i32 : i32 to index
    %c0_71 = arith.constant 0 : index
    %c0_72 = arith.constant 0 : index
    %314 = vector.load %arg9[%313, %c0_71, %c0_72] : memref<8x8x32xf32, #tpu.memory_space<vmem>>, vector<1x8x32xf32>
    %315 = vector.shape_cast %314 : vector<1x8x32xf32> to vector<8x32xf32>
    %316 = vector.shape_cast %283 : vector<8x32xf32> to vector<1x8x32xf32>
    tpu.vector_store %arg9[%313, %c0_71, %c0_72], %316 {strides = array<i32>} : memref<8x8x32xf32, #tpu.memory_space<vmem>>, vector<1x8x32xf32>,
    %317 = arith.index_cast %244 : i32 to index
    %c0_73 = arith.constant 0 : index
    %c0_74 = arith.constant 0 : index
    %318 = vector.load %arg10[%317, %c0_73, %c0_74] : memref<8x8x32xf32, #tpu.memory_space<vmem>>, vector<1x8x32xf32>
    %319 = vector.shape_cast %318 : vector<1x8x32xf32> to vector<8x32xf32>
    %320 = vector.shape_cast %312 : vector<8x32xf32> to vector<1x8x32xf32>
    tpu.vector_store %arg10[%317, %c0_73, %c0_74], %320 {strides = array<i32>} : memref<8x8x32xf32, #tpu.memory_space<vmem>>, vector<1x8x32xf32>,
    %c4_i32 = arith.constant 4 : i32
    %c7_i32_75 = arith.constant 7 : i32
    %321 = arith.subi %c7_i32_75, %c4_i32 : i32
    %322 = arith.index_cast %c4_i32 : i32 to index
    %c0_76 = arith.constant 0 : index
    %c0_77 = arith.constant 0 : index
    %323 = vector.load %arg8[%322, %c0_76, %c0_77] : memref<8x8x256xf32, #tpu.memory_space<vmem>>, vector<1x8x256xf32>
    %324 = vector.shape_cast %323 : vector<1x8x256xf32> to vector<8x256xf32>
    %325 = arith.index_cast %321 : i32 to index
    %c0_78 = arith.constant 0 : index
    %c0_79 = arith.constant 0 : index
    %326 = vector.load %arg8[%325, %c0_78, %c0_79] : memref<8x8x256xf32, #tpu.memory_space<vmem>>, vector<1x8x256xf32>
    %327 = vector.shape_cast %326 : vector<1x8x256xf32> to vector<8x256xf32>
    %328 = vector.broadcast %c4_i32 : i32 to vector<8x1xi32>
    %329 = arith.cmpi sgt, %9, %328 : vector<8x1xi32>
    %330 = vector.broadcast %321 : i32 to vector<8x1xi32>
    %331 = arith.cmpi sgt, %9, %330 : vector<8x1xi32>
    %332 = vector.extract_strided_slice %324 {offsets = [0, 0], sizes = [8, 128], strides = [1, 1]} : vector<8x256xf32> to vector<8x128xf32>
    %333 = arith.truncf %279 : vector<8x32xf32> to vector<8x32xbf16>
    %cst_80 = arith.constant dense<0.000000e+00> : vector<8x128xf32>
    %334 = tpu.matmul %333, %10, %cst_80 {dimension_numbers = #tpu.dot_dimension_numbers<[1], [0], [0], [1], [0, 0, 1, 1], [], []>} : vector<8x32xbf16>, vector<32x128xbf16>, vector<8x128xf32> -> vector<8x128xf32>
    %335 = arith.addf %332, %334 : vector<8x128xf32>
    %336 = arith.negf %335 : vector<8x128xf32>
    %337 = math.exp %336 : vector<8x128xf32>
    %cst_81 = arith.constant 1.000000e+00 : f32
    %338 = vector.broadcast %cst_81 : f32 to vector<8x128xf32>
    %339 = arith.addf %338, %337 : vector<8x128xf32>
    %340 = arith.divf %338, %339 : vector<8x128xf32>
    %341 = math.tanh %335 : vector<8x128xf32>
    %342 = vector.extract_strided_slice %340 {offsets = [0, 0], sizes = [8, 32], strides = [1, 1]} : vector<8x128xf32> to vector<8x32xf32>
    %343 = vector.extract_strided_slice %340 {offsets = [0, 32], sizes = [8, 32], strides = [1, 1]} : vector<8x128xf32> to vector<8x32xf32>
    %344 = vector.extract_strided_slice %341 {offsets = [0, 64], sizes = [8, 32], strides = [1, 1]} : vector<8x128xf32> to vector<8x32xf32>
    %345 = vector.extract_strided_slice %340 {offsets = [0, 96], sizes = [8, 32], strides = [1, 1]} : vector<8x128xf32> to vector<8x32xf32>
    %346 = arith.mulf %343, %276 : vector<8x32xf32>
    %347 = arith.mulf %342, %344 : vector<8x32xf32>
    %348 = arith.addf %346, %347 : vector<8x32xf32>
    %349 = math.tanh %348 : vector<8x32xf32>
    %350 = arith.mulf %345, %349 : vector<8x32xf32>
    %351 = vector.shape_cast %329 : vector<8x1xi1> to vector<8x1xi1>
    %352 = vector.broadcast %351 : vector<8x1xi1> to vector<8x32xi1>
    %353 = arith.select %352, %348, %276 : vector<8x32xi1>, vector<8x32xf32>
    %354 = vector.shape_cast %329 : vector<8x1xi1> to vector<8x1xi1>
    %355 = vector.broadcast %354 : vector<8x1xi1> to vector<8x32xi1>
    %356 = arith.select %355, %350, %279 : vector<8x32xi1>, vector<8x32xf32>
    %cst_82 = arith.constant 0.000000e+00 : f32
    %357 = vector.shape_cast %329 : vector<8x1xi1> to vector<8x1xi1>
    %358 = vector.broadcast %357 : vector<8x1xi1> to vector<8x32xi1>
    %359 = vector.broadcast %cst_82 : f32 to vector<8x32xf32>
    %360 = arith.select %358, %350, %359 : vector<8x32xi1>, vector<8x32xf32>
    %361 = vector.extract_strided_slice %327 {offsets = [0, 128], sizes = [8, 128], strides = [1, 1]} : vector<8x256xf32> to vector<8x128xf32>
    %362 = arith.truncf %308 : vector<8x32xf32> to vector<8x32xbf16>
    %cst_83 = arith.constant dense<0.000000e+00> : vector<8x128xf32>
    %363 = tpu.matmul %362, %11, %cst_83 {dimension_numbers = #tpu.dot_dimension_numbers<[1], [0], [0], [1], [0, 0, 1, 1], [], []>} : vector<8x32xbf16>, vector<32x128xbf16>, vector<8x128xf32> -> vector<8x128xf32>
    %364 = arith.addf %361, %363 : vector<8x128xf32>
    %365 = arith.negf %364 : vector<8x128xf32>
    %366 = math.exp %365 : vector<8x128xf32>
    %cst_84 = arith.constant 1.000000e+00 : f32
    %367 = vector.broadcast %cst_84 : f32 to vector<8x128xf32>
    %368 = arith.addf %367, %366 : vector<8x128xf32>
    %369 = arith.divf %367, %368 : vector<8x128xf32>
    %370 = math.tanh %364 : vector<8x128xf32>
    %371 = vector.extract_strided_slice %369 {offsets = [0, 0], sizes = [8, 32], strides = [1, 1]} : vector<8x128xf32> to vector<8x32xf32>
    %372 = vector.extract_strided_slice %369 {offsets = [0, 32], sizes = [8, 32], strides = [1, 1]} : vector<8x128xf32> to vector<8x32xf32>
    %373 = vector.extract_strided_slice %370 {offsets = [0, 64], sizes = [8, 32], strides = [1, 1]} : vector<8x128xf32> to vector<8x32xf32>
    %374 = vector.extract_strided_slice %369 {offsets = [0, 96], sizes = [8, 32], strides = [1, 1]} : vector<8x128xf32> to vector<8x32xf32>
    %375 = arith.mulf %372, %305 : vector<8x32xf32>
    %376 = arith.mulf %371, %373 : vector<8x32xf32>
    %377 = arith.addf %375, %376 : vector<8x32xf32>
    %378 = math.tanh %377 : vector<8x32xf32>
    %379 = arith.mulf %374, %378 : vector<8x32xf32>
    %380 = vector.shape_cast %331 : vector<8x1xi1> to vector<8x1xi1>
    %381 = vector.broadcast %380 : vector<8x1xi1> to vector<8x32xi1>
    %382 = arith.select %381, %377, %305 : vector<8x32xi1>, vector<8x32xf32>
    %383 = vector.shape_cast %331 : vector<8x1xi1> to vector<8x1xi1>
    %384 = vector.broadcast %383 : vector<8x1xi1> to vector<8x32xi1>
    %385 = arith.select %384, %379, %308 : vector<8x32xi1>, vector<8x32xf32>
    %cst_85 = arith.constant 0.000000e+00 : f32
    %386 = vector.shape_cast %331 : vector<8x1xi1> to vector<8x1xi1>
    %387 = vector.broadcast %386 : vector<8x1xi1> to vector<8x32xi1>
    %388 = vector.broadcast %cst_85 : f32 to vector<8x32xf32>
    %389 = arith.select %387, %379, %388 : vector<8x32xi1>, vector<8x32xf32>
    %390 = arith.index_cast %c4_i32 : i32 to index
    %c0_86 = arith.constant 0 : index
    %c0_87 = arith.constant 0 : index
    %391 = vector.load %arg9[%390, %c0_86, %c0_87] : memref<8x8x32xf32, #tpu.memory_space<vmem>>, vector<1x8x32xf32>
    %392 = vector.shape_cast %391 : vector<1x8x32xf32> to vector<8x32xf32>
    %393 = vector.shape_cast %360 : vector<8x32xf32> to vector<1x8x32xf32>
    tpu.vector_store %arg9[%390, %c0_86, %c0_87], %393 {strides = array<i32>} : memref<8x8x32xf32, #tpu.memory_space<vmem>>, vector<1x8x32xf32>,
    %394 = arith.index_cast %321 : i32 to index
    %c0_88 = arith.constant 0 : index
    %c0_89 = arith.constant 0 : index
    %395 = vector.load %arg10[%394, %c0_88, %c0_89] : memref<8x8x32xf32, #tpu.memory_space<vmem>>, vector<1x8x32xf32>
    %396 = vector.shape_cast %395 : vector<1x8x32xf32> to vector<8x32xf32>
    %397 = vector.shape_cast %389 : vector<8x32xf32> to vector<1x8x32xf32>
    tpu.vector_store %arg10[%394, %c0_88, %c0_89], %397 {strides = array<i32>} : memref<8x8x32xf32, #tpu.memory_space<vmem>>, vector<1x8x32xf32>,
    %c5_i32 = arith.constant 5 : i32
    %c7_i32_90 = arith.constant 7 : i32
    %398 = arith.subi %c7_i32_90, %c5_i32 : i32
    %399 = arith.index_cast %c5_i32 : i32 to index
    %c0_91 = arith.constant 0 : index
    %c0_92 = arith.constant 0 : index
    %400 = vector.load %arg8[%399, %c0_91, %c0_92] : memref<8x8x256xf32, #tpu.memory_space<vmem>>, vector<1x8x256xf32>
    %401 = vector.shape_cast %400 : vector<1x8x256xf32> to vector<8x256xf32>
    %402 = arith.index_cast %398 : i32 to index
    %c0_93 = arith.constant 0 : index
    %c0_94 = arith.constant 0 : index
    %403 = vector.load %arg8[%402, %c0_93, %c0_94] : memref<8x8x256xf32, #tpu.memory_space<vmem>>, vector<1x8x256xf32>
    %404 = vector.shape_cast %403 : vector<1x8x256xf32> to vector<8x256xf32>
    %405 = vector.broadcast %c5_i32 : i32 to vector<8x1xi32>
    %406 = arith.cmpi sgt, %9, %405 : vector<8x1xi32>
    %407 = vector.broadcast %398 : i32 to vector<8x1xi32>
    %408 = arith.cmpi sgt, %9, %407 : vector<8x1xi32>
    %409 = vector.extract_strided_slice %401 {offsets = [0, 0], sizes = [8, 128], strides = [1, 1]} : vector<8x256xf32> to vector<8x128xf32>
    %410 = arith.truncf %356 : vector<8x32xf32> to vector<8x32xbf16>
    %cst_95 = arith.constant dense<0.000000e+00> : vector<8x128xf32>
    %411 = tpu.matmul %410, %10, %cst_95 {dimension_numbers = #tpu.dot_dimension_numbers<[1], [0], [0], [1], [0, 0, 1, 1], [], []>} : vector<8x32xbf16>, vector<32x128xbf16>, vector<8x128xf32> -> vector<8x128xf32>
    %412 = arith.addf %409, %411 : vector<8x128xf32>
    %413 = arith.negf %412 : vector<8x128xf32>
    %414 = math.exp %413 : vector<8x128xf32>
    %cst_96 = arith.constant 1.000000e+00 : f32
    %415 = vector.broadcast %cst_96 : f32 to vector<8x128xf32>
    %416 = arith.addf %415, %414 : vector<8x128xf32>
    %417 = arith.divf %415, %416 : vector<8x128xf32>
    %418 = math.tanh %412 : vector<8x128xf32>
    %419 = vector.extract_strided_slice %417 {offsets = [0, 0], sizes = [8, 32], strides = [1, 1]} : vector<8x128xf32> to vector<8x32xf32>
    %420 = vector.extract_strided_slice %417 {offsets = [0, 32], sizes = [8, 32], strides = [1, 1]} : vector<8x128xf32> to vector<8x32xf32>
    %421 = vector.extract_strided_slice %418 {offsets = [0, 64], sizes = [8, 32], strides = [1, 1]} : vector<8x128xf32> to vector<8x32xf32>
    %422 = vector.extract_strided_slice %417 {offsets = [0, 96], sizes = [8, 32], strides = [1, 1]} : vector<8x128xf32> to vector<8x32xf32>
    %423 = arith.mulf %420, %353 : vector<8x32xf32>
    %424 = arith.mulf %419, %421 : vector<8x32xf32>
    %425 = arith.addf %423, %424 : vector<8x32xf32>
    %426 = math.tanh %425 : vector<8x32xf32>
    %427 = arith.mulf %422, %426 : vector<8x32xf32>
    %428 = vector.shape_cast %406 : vector<8x1xi1> to vector<8x1xi1>
    %429 = vector.broadcast %428 : vector<8x1xi1> to vector<8x32xi1>
    %430 = arith.select %429, %425, %353 : vector<8x32xi1>, vector<8x32xf32>
    %431 = vector.shape_cast %406 : vector<8x1xi1> to vector<8x1xi1>
    %432 = vector.broadcast %431 : vector<8x1xi1> to vector<8x32xi1>
    %433 = arith.select %432, %427, %356 : vector<8x32xi1>, vector<8x32xf32>
    %cst_97 = arith.constant 0.000000e+00 : f32
    %434 = vector.shape_cast %406 : vector<8x1xi1> to vector<8x1xi1>
    %435 = vector.broadcast %434 : vector<8x1xi1> to vector<8x32xi1>
    %436 = vector.broadcast %cst_97 : f32 to vector<8x32xf32>
    %437 = arith.select %435, %427, %436 : vector<8x32xi1>, vector<8x32xf32>
    %438 = vector.extract_strided_slice %404 {offsets = [0, 128], sizes = [8, 128], strides = [1, 1]} : vector<8x256xf32> to vector<8x128xf32>
    %439 = arith.truncf %385 : vector<8x32xf32> to vector<8x32xbf16>
    %cst_98 = arith.constant dense<0.000000e+00> : vector<8x128xf32>
    %440 = tpu.matmul %439, %11, %cst_98 {dimension_numbers = #tpu.dot_dimension_numbers<[1], [0], [0], [1], [0, 0, 1, 1], [], []>} : vector<8x32xbf16>, vector<32x128xbf16>, vector<8x128xf32> -> vector<8x128xf32>
    %441 = arith.addf %438, %440 : vector<8x128xf32>
    %442 = arith.negf %441 : vector<8x128xf32>
    %443 = math.exp %442 : vector<8x128xf32>
    %cst_99 = arith.constant 1.000000e+00 : f32
    %444 = vector.broadcast %cst_99 : f32 to vector<8x128xf32>
    %445 = arith.addf %444, %443 : vector<8x128xf32>
    %446 = arith.divf %444, %445 : vector<8x128xf32>
    %447 = math.tanh %441 : vector<8x128xf32>
    %448 = vector.extract_strided_slice %446 {offsets = [0, 0], sizes = [8, 32], strides = [1, 1]} : vector<8x128xf32> to vector<8x32xf32>
    %449 = vector.extract_strided_slice %446 {offsets = [0, 32], sizes = [8, 32], strides = [1, 1]} : vector<8x128xf32> to vector<8x32xf32>
    %450 = vector.extract_strided_slice %447 {offsets = [0, 64], sizes = [8, 32], strides = [1, 1]} : vector<8x128xf32> to vector<8x32xf32>
    %451 = vector.extract_strided_slice %446 {offsets = [0, 96], sizes = [8, 32], strides = [1, 1]} : vector<8x128xf32> to vector<8x32xf32>
    %452 = arith.mulf %449, %382 : vector<8x32xf32>
    %453 = arith.mulf %448, %450 : vector<8x32xf32>
    %454 = arith.addf %452, %453 : vector<8x32xf32>
    %455 = math.tanh %454 : vector<8x32xf32>
    %456 = arith.mulf %451, %455 : vector<8x32xf32>
    %457 = vector.shape_cast %408 : vector<8x1xi1> to vector<8x1xi1>
    %458 = vector.broadcast %457 : vector<8x1xi1> to vector<8x32xi1>
    %459 = arith.select %458, %454, %382 : vector<8x32xi1>, vector<8x32xf32>
    %460 = vector.shape_cast %408 : vector<8x1xi1> to vector<8x1xi1>
    %461 = vector.broadcast %460 : vector<8x1xi1> to vector<8x32xi1>
    %462 = arith.select %461, %456, %385 : vector<8x32xi1>, vector<8x32xf32>
    %cst_100 = arith.constant 0.000000e+00 : f32
    %463 = vector.shape_cast %408 : vector<8x1xi1> to vector<8x1xi1>
    %464 = vector.broadcast %463 : vector<8x1xi1> to vector<8x32xi1>
    %465 = vector.broadcast %cst_100 : f32 to vector<8x32xf32>
    %466 = arith.select %464, %456, %465 : vector<8x32xi1>, vector<8x32xf32>
    %467 = arith.index_cast %c5_i32 : i32 to index
    %c0_101 = arith.constant 0 : index
    %c0_102 = arith.constant 0 : index
    %468 = vector.load %arg9[%467, %c0_101, %c0_102] : memref<8x8x32xf32, #tpu.memory_space<vmem>>, vector<1x8x32xf32>
    %469 = vector.shape_cast %468 : vector<1x8x32xf32> to vector<8x32xf32>
    %470 = vector.shape_cast %437 : vector<8x32xf32> to vector<1x8x32xf32>
    tpu.vector_store %arg9[%467, %c0_101, %c0_102], %470 {strides = array<i32>} : memref<8x8x32xf32, #tpu.memory_space<vmem>>, vector<1x8x32xf32>,
    %471 = arith.index_cast %398 : i32 to index
    %c0_103 = arith.constant 0 : index
    %c0_104 = arith.constant 0 : index
    %472 = vector.load %arg10[%471, %c0_103, %c0_104] : memref<8x8x32xf32, #tpu.memory_space<vmem>>, vector<1x8x32xf32>
    %473 = vector.shape_cast %472 : vector<1x8x32xf32> to vector<8x32xf32>
    %474 = vector.shape_cast %466 : vector<8x32xf32> to vector<1x8x32xf32>
    tpu.vector_store %arg10[%471, %c0_103, %c0_104], %474 {strides = array<i32>} : memref<8x8x32xf32, #tpu.memory_space<vmem>>, vector<1x8x32xf32>,
    %c6_i32 = arith.constant 6 : i32
    %c7_i32_105 = arith.constant 7 : i32
    %475 = arith.subi %c7_i32_105, %c6_i32 : i32
    %476 = arith.index_cast %c6_i32 : i32 to index
    %c0_106 = arith.constant 0 : index
    %c0_107 = arith.constant 0 : index
    %477 = vector.load %arg8[%476, %c0_106, %c0_107] : memref<8x8x256xf32, #tpu.memory_space<vmem>>, vector<1x8x256xf32>
    %478 = vector.shape_cast %477 : vector<1x8x256xf32> to vector<8x256xf32>
    %479 = arith.index_cast %475 : i32 to index
    %c0_108 = arith.constant 0 : index
    %c0_109 = arith.constant 0 : index
    %480 = vector.load %arg8[%479, %c0_108, %c0_109] : memref<8x8x256xf32, #tpu.memory_space<vmem>>, vector<1x8x256xf32>
    %481 = vector.shape_cast %480 : vector<1x8x256xf32> to vector<8x256xf32>
    %482 = vector.broadcast %c6_i32 : i32 to vector<8x1xi32>
    %483 = arith.cmpi sgt, %9, %482 : vector<8x1xi32>
    %484 = vector.broadcast %475 : i32 to vector<8x1xi32>
    %485 = arith.cmpi sgt, %9, %484 : vector<8x1xi32>
    %486 = vector.extract_strided_slice %478 {offsets = [0, 0], sizes = [8, 128], strides = [1, 1]} : vector<8x256xf32> to vector<8x128xf32>
    %487 = arith.truncf %433 : vector<8x32xf32> to vector<8x32xbf16>
    %cst_110 = arith.constant dense<0.000000e+00> : vector<8x128xf32>
    %488 = tpu.matmul %487, %10, %cst_110 {dimension_numbers = #tpu.dot_dimension_numbers<[1], [0], [0], [1], [0, 0, 1, 1], [], []>} : vector<8x32xbf16>, vector<32x128xbf16>, vector<8x128xf32> -> vector<8x128xf32>
    %489 = arith.addf %486, %488 : vector<8x128xf32>
    %490 = arith.negf %489 : vector<8x128xf32>
    %491 = math.exp %490 : vector<8x128xf32>
    %cst_111 = arith.constant 1.000000e+00 : f32
    %492 = vector.broadcast %cst_111 : f32 to vector<8x128xf32>
    %493 = arith.addf %492, %491 : vector<8x128xf32>
    %494 = arith.divf %492, %493 : vector<8x128xf32>
    %495 = math.tanh %489 : vector<8x128xf32>
    %496 = vector.extract_strided_slice %494 {offsets = [0, 0], sizes = [8, 32], strides = [1, 1]} : vector<8x128xf32> to vector<8x32xf32>
    %497 = vector.extract_strided_slice %494 {offsets = [0, 32], sizes = [8, 32], strides = [1, 1]} : vector<8x128xf32> to vector<8x32xf32>
    %498 = vector.extract_strided_slice %495 {offsets = [0, 64], sizes = [8, 32], strides = [1, 1]} : vector<8x128xf32> to vector<8x32xf32>
    %499 = vector.extract_strided_slice %494 {offsets = [0, 96], sizes = [8, 32], strides = [1, 1]} : vector<8x128xf32> to vector<8x32xf32>
    %500 = arith.mulf %497, %430 : vector<8x32xf32>
    %501 = arith.mulf %496, %498 : vector<8x32xf32>
    %502 = arith.addf %500, %501 : vector<8x32xf32>
    %503 = math.tanh %502 : vector<8x32xf32>
    %504 = arith.mulf %499, %503 : vector<8x32xf32>
    %505 = vector.shape_cast %483 : vector<8x1xi1> to vector<8x1xi1>
    %506 = vector.broadcast %505 : vector<8x1xi1> to vector<8x32xi1>
    %507 = arith.select %506, %502, %430 : vector<8x32xi1>, vector<8x32xf32>
    %508 = vector.shape_cast %483 : vector<8x1xi1> to vector<8x1xi1>
    %509 = vector.broadcast %508 : vector<8x1xi1> to vector<8x32xi1>
    %510 = arith.select %509, %504, %433 : vector<8x32xi1>, vector<8x32xf32>
    %cst_112 = arith.constant 0.000000e+00 : f32
    %511 = vector.shape_cast %483 : vector<8x1xi1> to vector<8x1xi1>
    %512 = vector.broadcast %511 : vector<8x1xi1> to vector<8x32xi1>
    %513 = vector.broadcast %cst_112 : f32 to vector<8x32xf32>
    %514 = arith.select %512, %504, %513 : vector<8x32xi1>, vector<8x32xf32>
    %515 = vector.extract_strided_slice %481 {offsets = [0, 128], sizes = [8, 128], strides = [1, 1]} : vector<8x256xf32> to vector<8x128xf32>
    %516 = arith.truncf %462 : vector<8x32xf32> to vector<8x32xbf16>
    %cst_113 = arith.constant dense<0.000000e+00> : vector<8x128xf32>
    %517 = tpu.matmul %516, %11, %cst_113 {dimension_numbers = #tpu.dot_dimension_numbers<[1], [0], [0], [1], [0, 0, 1, 1], [], []>} : vector<8x32xbf16>, vector<32x128xbf16>, vector<8x128xf32> -> vector<8x128xf32>
    %518 = arith.addf %515, %517 : vector<8x128xf32>
    %519 = arith.negf %518 : vector<8x128xf32>
    %520 = math.exp %519 : vector<8x128xf32>
    %cst_114 = arith.constant 1.000000e+00 : f32
    %521 = vector.broadcast %cst_114 : f32 to vector<8x128xf32>
    %522 = arith.addf %521, %520 : vector<8x128xf32>
    %523 = arith.divf %521, %522 : vector<8x128xf32>
    %524 = math.tanh %518 : vector<8x128xf32>
    %525 = vector.extract_strided_slice %523 {offsets = [0, 0], sizes = [8, 32], strides = [1, 1]} : vector<8x128xf32> to vector<8x32xf32>
    %526 = vector.extract_strided_slice %523 {offsets = [0, 32], sizes = [8, 32], strides = [1, 1]} : vector<8x128xf32> to vector<8x32xf32>
    %527 = vector.extract_strided_slice %524 {offsets = [0, 64], sizes = [8, 32], strides = [1, 1]} : vector<8x128xf32> to vector<8x32xf32>
    %528 = vector.extract_strided_slice %523 {offsets = [0, 96], sizes = [8, 32], strides = [1, 1]} : vector<8x128xf32> to vector<8x32xf32>
    %529 = arith.mulf %526, %459 : vector<8x32xf32>
    %530 = arith.mulf %525, %527 : vector<8x32xf32>
    %531 = arith.addf %529, %530 : vector<8x32xf32>
    %532 = math.tanh %531 : vector<8x32xf32>
    %533 = arith.mulf %528, %532 : vector<8x32xf32>
    %534 = vector.shape_cast %485 : vector<8x1xi1> to vector<8x1xi1>
    %535 = vector.broadcast %534 : vector<8x1xi1> to vector<8x32xi1>
    %536 = arith.select %535, %531, %459 : vector<8x32xi1>, vector<8x32xf32>
    %537 = vector.shape_cast %485 : vector<8x1xi1> to vector<8x1xi1>
    %538 = vector.broadcast %537 : vector<8x1xi1> to vector<8x32xi1>
    %539 = arith.select %538, %533, %462 : vector<8x32xi1>, vector<8x32xf32>
    %cst_115 = arith.constant 0.000000e+00 : f32
    %540 = vector.shape_cast %485 : vector<8x1xi1> to vector<8x1xi1>
    %541 = vector.broadcast %540 : vector<8x1xi1> to vector<8x32xi1>
    %542 = vector.broadcast %cst_115 : f32 to vector<8x32xf32>
    %543 = arith.select %541, %533, %542 : vector<8x32xi1>, vector<8x32xf32>
    %544 = arith.index_cast %c6_i32 : i32 to index
    %c0_116 = arith.constant 0 : index
    %c0_117 = arith.constant 0 : index
    %545 = vector.load %arg9[%544, %c0_116, %c0_117] : memref<8x8x32xf32, #tpu.memory_space<vmem>>, vector<1x8x32xf32>
    %546 = vector.shape_cast %545 : vector<1x8x32xf32> to vector<8x32xf32>
    %547 = vector.shape_cast %514 : vector<8x32xf32> to vector<1x8x32xf32>
    tpu.vector_store %arg9[%544, %c0_116, %c0_117], %547 {strides = array<i32>} : memref<8x8x32xf32, #tpu.memory_space<vmem>>, vector<1x8x32xf32>,
    %548 = arith.index_cast %475 : i32 to index
    %c0_118 = arith.constant 0 : index
    %c0_119 = arith.constant 0 : index
    %549 = vector.load %arg10[%548, %c0_118, %c0_119] : memref<8x8x32xf32, #tpu.memory_space<vmem>>, vector<1x8x32xf32>
    %550 = vector.shape_cast %549 : vector<1x8x32xf32> to vector<8x32xf32>
    %551 = vector.shape_cast %543 : vector<8x32xf32> to vector<1x8x32xf32>
    tpu.vector_store %arg10[%548, %c0_118, %c0_119], %551 {strides = array<i32>} : memref<8x8x32xf32, #tpu.memory_space<vmem>>, vector<1x8x32xf32>,
    %c7_i32_120 = arith.constant 7 : i32
    %c7_i32_121 = arith.constant 7 : i32
    %552 = arith.subi %c7_i32_121, %c7_i32_120 : i32
    %553 = arith.index_cast %c7_i32_120 : i32 to index
    %c0_122 = arith.constant 0 : index
    %c0_123 = arith.constant 0 : index
    %554 = vector.load %arg8[%553, %c0_122, %c0_123] : memref<8x8x256xf32, #tpu.memory_space<vmem>>, vector<1x8x256xf32>
    %555 = vector.shape_cast %554 : vector<1x8x256xf32> to vector<8x256xf32>
    %556 = arith.index_cast %552 : i32 to index
    %c0_124 = arith.constant 0 : index
    %c0_125 = arith.constant 0 : index
    %557 = vector.load %arg8[%556, %c0_124, %c0_125] : memref<8x8x256xf32, #tpu.memory_space<vmem>>, vector<1x8x256xf32>
    %558 = vector.shape_cast %557 : vector<1x8x256xf32> to vector<8x256xf32>
    %559 = vector.broadcast %c7_i32_120 : i32 to vector<8x1xi32>
    %560 = arith.cmpi sgt, %9, %559 : vector<8x1xi32>
    %561 = vector.broadcast %552 : i32 to vector<8x1xi32>
    %562 = arith.cmpi sgt, %9, %561 : vector<8x1xi32>
    %563 = vector.extract_strided_slice %555 {offsets = [0, 0], sizes = [8, 128], strides = [1, 1]} : vector<8x256xf32> to vector<8x128xf32>
    %564 = arith.truncf %510 : vector<8x32xf32> to vector<8x32xbf16>
    %cst_126 = arith.constant dense<0.000000e+00> : vector<8x128xf32>
    %565 = tpu.matmul %564, %10, %cst_126 {dimension_numbers = #tpu.dot_dimension_numbers<[1], [0], [0], [1], [0, 0, 1, 1], [], []>} : vector<8x32xbf16>, vector<32x128xbf16>, vector<8x128xf32> -> vector<8x128xf32>
    %566 = arith.addf %563, %565 : vector<8x128xf32>
    %567 = arith.negf %566 : vector<8x128xf32>
    %568 = math.exp %567 : vector<8x128xf32>
    %cst_127 = arith.constant 1.000000e+00 : f32
    %569 = vector.broadcast %cst_127 : f32 to vector<8x128xf32>
    %570 = arith.addf %569, %568 : vector<8x128xf32>
    %571 = arith.divf %569, %570 : vector<8x128xf32>
    %572 = math.tanh %566 : vector<8x128xf32>
    %573 = vector.extract_strided_slice %571 {offsets = [0, 0], sizes = [8, 32], strides = [1, 1]} : vector<8x128xf32> to vector<8x32xf32>
    %574 = vector.extract_strided_slice %571 {offsets = [0, 32], sizes = [8, 32], strides = [1, 1]} : vector<8x128xf32> to vector<8x32xf32>
    %575 = vector.extract_strided_slice %572 {offsets = [0, 64], sizes = [8, 32], strides = [1, 1]} : vector<8x128xf32> to vector<8x32xf32>
    %576 = vector.extract_strided_slice %571 {offsets = [0, 96], sizes = [8, 32], strides = [1, 1]} : vector<8x128xf32> to vector<8x32xf32>
    %577 = arith.mulf %574, %507 : vector<8x32xf32>
    %578 = arith.mulf %573, %575 : vector<8x32xf32>
    %579 = arith.addf %577, %578 : vector<8x32xf32>
    %580 = math.tanh %579 : vector<8x32xf32>
    %581 = arith.mulf %576, %580 : vector<8x32xf32>
    %582 = vector.shape_cast %560 : vector<8x1xi1> to vector<8x1xi1>
    %583 = vector.broadcast %582 : vector<8x1xi1> to vector<8x32xi1>
    %584 = arith.select %583, %579, %507 : vector<8x32xi1>, vector<8x32xf32>
    %585 = vector.shape_cast %560 : vector<8x1xi1> to vector<8x1xi1>
    %586 = vector.broadcast %585 : vector<8x1xi1> to vector<8x32xi1>
    %587 = arith.select %586, %581, %510 : vector<8x32xi1>, vector<8x32xf32>
    %cst_128 = arith.constant 0.000000e+00 : f32
    %588 = vector.shape_cast %560 : vector<8x1xi1> to vector<8x1xi1>
    %589 = vector.broadcast %588 : vector<8x1xi1> to vector<8x32xi1>
    %590 = vector.broadcast %cst_128 : f32 to vector<8x32xf32>
    %591 = arith.select %589, %581, %590 : vector<8x32xi1>, vector<8x32xf32>
    %592 = vector.extract_strided_slice %558 {offsets = [0, 128], sizes = [8, 128], strides = [1, 1]} : vector<8x256xf32> to vector<8x128xf32>
    %593 = arith.truncf %539 : vector<8x32xf32> to vector<8x32xbf16>
    %cst_129 = arith.constant dense<0.000000e+00> : vector<8x128xf32>
    %594 = tpu.matmul %593, %11, %cst_129 {dimension_numbers = #tpu.dot_dimension_numbers<[1], [0], [0], [1], [0, 0, 1, 1], [], []>} : vector<8x32xbf16>, vector<32x128xbf16>, vector<8x128xf32> -> vector<8x128xf32>
    %595 = arith.addf %592, %594 : vector<8x128xf32>
    %596 = arith.negf %595 : vector<8x128xf32>
    %597 = math.exp %596 : vector<8x128xf32>
    %cst_130 = arith.constant 1.000000e+00 : f32
    %598 = vector.broadcast %cst_130 : f32 to vector<8x128xf32>
    %599 = arith.addf %598, %597 : vector<8x128xf32>
    %600 = arith.divf %598, %599 : vector<8x128xf32>
    %601 = math.tanh %595 : vector<8x128xf32>
    %602 = vector.extract_strided_slice %600 {offsets = [0, 0], sizes = [8, 32], strides = [1, 1]} : vector<8x128xf32> to vector<8x32xf32>
    %603 = vector.extract_strided_slice %600 {offsets = [0, 32], sizes = [8, 32], strides = [1, 1]} : vector<8x128xf32> to vector<8x32xf32>
    %604 = vector.extract_strided_slice %601 {offsets = [0, 64], sizes = [8, 32], strides = [1, 1]} : vector<8x128xf32> to vector<8x32xf32>
    %605 = vector.extract_strided_slice %600 {offsets = [0, 96], sizes = [8, 32], strides = [1, 1]} : vector<8x128xf32> to vector<8x32xf32>
    %606 = arith.mulf %603, %536 : vector<8x32xf32>
    %607 = arith.mulf %602, %604 : vector<8x32xf32>
    %608 = arith.addf %606, %607 : vector<8x32xf32>
    %609 = math.tanh %608 : vector<8x32xf32>
    %610 = arith.mulf %605, %609 : vector<8x32xf32>
    %611 = vector.shape_cast %562 : vector<8x1xi1> to vector<8x1xi1>
    %612 = vector.broadcast %611 : vector<8x1xi1> to vector<8x32xi1>
    %613 = arith.select %612, %608, %536 : vector<8x32xi1>, vector<8x32xf32>
    %614 = vector.shape_cast %562 : vector<8x1xi1> to vector<8x1xi1>
    %615 = vector.broadcast %614 : vector<8x1xi1> to vector<8x32xi1>
    %616 = arith.select %615, %610, %539 : vector<8x32xi1>, vector<8x32xf32>
    %cst_131 = arith.constant 0.000000e+00 : f32
    %617 = vector.shape_cast %562 : vector<8x1xi1> to vector<8x1xi1>
    %618 = vector.broadcast %617 : vector<8x1xi1> to vector<8x32xi1>
    %619 = vector.broadcast %cst_131 : f32 to vector<8x32xf32>
    %620 = arith.select %618, %610, %619 : vector<8x32xi1>, vector<8x32xf32>
    %621 = arith.index_cast %c7_i32_120 : i32 to index
    %c0_132 = arith.constant 0 : index
    %c0_133 = arith.constant 0 : index
    %622 = vector.load %arg9[%621, %c0_132, %c0_133] : memref<8x8x32xf32, #tpu.memory_space<vmem>>, vector<1x8x32xf32>
    %623 = vector.shape_cast %622 : vector<1x8x32xf32> to vector<8x32xf32>
    %624 = vector.shape_cast %591 : vector<8x32xf32> to vector<1x8x32xf32>
    tpu.vector_store %arg9[%621, %c0_132, %c0_133], %624 {strides = array<i32>} : memref<8x8x32xf32, #tpu.memory_space<vmem>>, vector<1x8x32xf32>,
    %625 = arith.index_cast %552 : i32 to index
    %c0_134 = arith.constant 0 : index
    %c0_135 = arith.constant 0 : index
    %626 = vector.load %arg10[%625, %c0_134, %c0_135] : memref<8x8x32xf32, #tpu.memory_space<vmem>>, vector<1x8x32xf32>
    %627 = vector.shape_cast %626 : vector<1x8x32xf32> to vector<8x32xf32>
    %628 = vector.shape_cast %620 : vector<8x32xf32> to vector<1x8x32xf32>
    tpu.vector_store %arg10[%625, %c0_134, %c0_135], %628 {strides = array<i32>} : memref<8x8x32xf32, #tpu.memory_space<vmem>>, vector<1x8x32xf32>,
    %c8_i32 = arith.constant 8 : i32
    %c0_136 = arith.constant 0 : index
    %c0_137 = arith.constant 0 : index
    %c0_138 = arith.constant 0 : index
    %629 = vector.load %arg9[%c0_136, %c0_137, %c0_138] : memref<8x8x32xf32, #tpu.memory_space<vmem>>, vector<8x8x32xf32>
    %c0_139 = arith.constant 0 : index
    %c0_140 = arith.constant 0 : index
    %c0_141 = arith.constant 0 : index
    %630 = vector.load %arg10[%c0_139, %c0_140, %c0_141] : memref<8x8x32xf32, #tpu.memory_space<vmem>>, vector<8x8x32xf32>
    %cst_142 = arith.constant 0.000000e+00 : f32
    %631 = vector.broadcast %cst_142 : f32 to vector<8x8x64xf32>
    %632 = tpu.concatenate %629, %630, %631 in 2 : vector<8x8x32xf32>, vector<8x8x32xf32>, vector<8x8x64xf32> -> vector<8x8x128xf32>
    %c0_143 = arith.constant 0 : index
    %c0_144 = arith.constant 0 : index
    %c0_145 = arith.constant 0 : index
    %633 = vector.load %arg7[%c0_143, %c0_144, %c0_145] : memref<8x8x128xf32, #tpu.memory_space<vmem>>, vector<8x8x128xf32>
    tpu.vector_store %arg7[%c0_143, %c0_144, %c0_145], %632 {strides = array<i32>} : memref<8x8x128xf32, #tpu.memory_space<vmem>>, vector<8x8x128xf32>,
    return
  }
  func.func @transform_0(%arg0: i32) -> (i32, i32, i32) {
    %c0_i32 = arith.constant 0 : i32
    %c0_i32_0 = arith.constant 0 : i32
    %c0_i32_1 = arith.constant 0 : i32
    %c0_i32_2 = arith.constant 0 : i32
    return %c0_i32, %c0_i32_0, %c0_i32_1 : i32, i32, i32
  }
  func.func @transform_1(%arg0: i32) -> (i32, i32) {
    %c0_i32 = arith.constant 0 : i32
    %c0_i32_0 = arith.constant 0 : i32
    %c0_i32_1 = arith.constant 0 : i32
    return %c0_i32, %c0_i32_0 : i32, i32
  }
  func.func @transform_2(%arg0: i32) -> (i32, i32) {
    %c0_i32 = arith.constant 0 : i32
    %c0_i32_0 = arith.constant 0 : i32
    %c0_i32_1 = arith.constant 0 : i32
    return %c0_i32, %c0_i32_0 : i32, i32
  }
  func.func @transform_3(%arg0: i32) -> (i32, i32) {
    %c0_i32 = arith.constant 0 : i32
    %c0_i32_0 = arith.constant 0 : i32
    %c0_i32_1 = arith.constant 0 : i32
    return %c0_i32, %c0_i32_0 : i32, i32
  }
  func.func @transform_4(%arg0: i32) -> (i32, i32) {
    %c0_i32 = arith.constant 0 : i32
    %c0_i32_0 = arith.constant 0 : i32
    %c0_i32_1 = arith.constant 0 : i32
    return %c0_i32, %c0_i32_0 : i32, i32
  }
  func.func @transform_5(%arg0: i32) -> (i32, i32) {
    %c0_i32 = arith.constant 0 : i32
    %c0_i32_0 = arith.constant 0 : i32
    %c0_i32_1 = arith.constant 0 : i32
    return %c0_i32, %c0_i32_0 : i32, i32
  }
  func.func @transform_6(%arg0: i32) -> (i32, i32, i32) {
    %c0_i32 = arith.constant 0 : i32
    %c0_i32_0 = arith.constant 0 : i32
    %c0_i32_1 = arith.constant 0 : i32
    %c0_i32_2 = arith.constant 0 : i32
    return %c0_i32, %c0_i32_0, %c0_i32_1 : i32, i32, i32
  }
}

</mosaic_0001>

<llo_original>
// kernel: tpu_custom_call.1
$region0: #{tpu_custom_call.1}
  #allocation0 [shape = 'u32[]', space=smem, size = 0x4, offset = 0x4, fixed_abs, tag = 'smem constant byte address 0x4 - core index']
  #allocation1 [shape = 'u32[144,128]{1,0:T(1,128)}', space=vmem, size = 0x12000, scoped, tag = 'internal scratch']
  #allocation2 [shape = 'f32[8,8,256]{2,1,0:T(8,128)}', space=vmem, size = 0x10000, scoped, tag = 'scratch operand']
  #allocation3 [shape = 'f32[8,8,32]{2,1,0:T(8,128)}', space=vmem, size = 0x8000, scoped, tag = 'scratch operand']
  #allocation4 [shape = 'f32[8,8,32]{2,1,0:T(8,128)}', space=vmem, size = 0x8000, scoped, tag = 'scratch operand']
  %s0 = inlined_call_operand.hbm [shape: bf16[8,8,128], index: 0, kind: input, shape index: {}]
  %s1 = inlined_call_operand.vmem [shape: s32[8,1], index: 1, kind: input, shape index: {}]
  %s2 = inlined_call_operand.hbm [shape: bf16[128,256], index: 2, kind: input, shape index: {}]
  %s3 = inlined_call_operand.vmem [shape: bf16[32,128], index: 3, kind: input, shape index: {}]
  %s4 = inlined_call_operand.hbm [shape: bf16[32,128], index: 4, kind: input, shape index: {}]
  %s5 = inlined_call_operand.vmem [shape: f32[1,256], index: 5, kind: input, shape index: {}]
  %s6 = inlined_call_operand.hbm [shape: f32[8,8,128], index: 6, kind: output, shape index: {}]
  %s7 = sld [smem:[#allocation0]]
  $region46: #{tpu_custom_call.1} parent=0
    _
  %s9 = ssub.s32 1, %s7
  %s10 = scalar_select 0, %s9, %s7
  $region1: #{tpu_custom_call.1} parent=0
    #allocation5 [shape = 'u8[16384]{0}', space=vmem, size = 0x4000, scoped, tag = 'input window, operand 0, single buffered']
    #allocation6 [shape = 's32[1]{0}', space=sflag, size = 0x4, scoped, tag = 'scoped memory for tpu_custom_call.1']
    #allocation7 [shape = 's32[1]{0}', space=sflag, size = 0x4, scoped, tag = 'scoped memory for tpu_custom_call.1']
    #allocation8 [shape = 'u8[65536]{0}', space=vmem, size = 0x10000, scoped, tag = 'input window, operand 2, single buffered']
    #allocation9 [shape = 's32[1]{0}', space=sflag, size = 0x4, scoped, tag = 'scoped memory for tpu_custom_call.1']
    #allocation10 [shape = 'u8[8192]{0}', space=vmem, size = 0x2000, scoped, tag = 'input window, operand 4, single buffered']
    #allocation11 [shape = 'u8[32768]{0}', space=vmem, size = 0x8000, scoped, tag = 'output window, operand 0, single buffered']
    %11 = vsyncpa [#allocation6], 0
    %12 = vsyncpa [#allocation9], 0
    %13 = vsyncpa [#allocation7], 0
    // Predicated region
    $region2: #{tpu_custom_call.1} parent=1 // pred_check
      _
    $region3: #{tpu_custom_call.1} parent=1 // pred_check_branch
      %15 = sbr.rel (0) target = $region5
    $region4: #{tpu_custom_call.1} parent=1 // pred_region
      %s17 = ssub.s32 512, 512
      %18 = vsyncadd [#allocation6], %s17
      %s19 = sshll.u32 [#allocation5], 4
      %s20 = int_to_ptr.vmem [resolvable:$true] %s19
      %25 = dma.hbm_to_vmem [thread:$0]  %s0, 512, %s20, [#allocation6], 64, 64, 4
    $region5: #{tpu_custom_call.1} parent=1 // pred_fallthru
      _
    // Predicated region
    $region6: #{tpu_custom_call.1} parent=1 // pred_check
      _
    $region7: #{tpu_custom_call.1} parent=1 // pred_check_branch
      %27 = sbr.rel (0) target = $region9
    $region8: #{tpu_custom_call.1} parent=1 // pred_region
      _
    $region9: #{tpu_custom_call.1} parent=1 // pred_fallthru
      _
    // Predicated region
    $region10: #{tpu_custom_call.1} parent=1 // pred_check
      _
    $region11: #{tpu_custom_call.1} parent=1 // pred_check_branch
      %29 = sbr.rel (0) target = $region13
    $region12: #{tpu_custom_call.1} parent=1 // pred_region
      %s31 = ssub.s32 2048, 2048
      %32 = vsyncadd [#allocation9], %s31
      %s33 = sshll.u32 [#allocation8], 4
      %s34 = int_to_ptr.vmem [resolvable:$true] %s33
      %39 = dma.hbm_to_vmem [thread:$0]  %s2, 2048, %s34, [#allocation9], 128, 128, 8
    $region13: #{tpu_custom_call.1} parent=1 // pred_fallthru
      _
    // Predicated region
    $region14: #{tpu_custom_call.1} parent=1 // pred_check
      _
    $region15: #{tpu_custom_call.1} parent=1 // pred_check_branch
      %41 = sbr.rel (0) target = $region17
    $region16: #{tpu_custom_call.1} parent=1 // pred_region
      _
    $region17: #{tpu_custom_call.1} parent=1 // pred_fallthru
      _
    // Predicated region
    $region18: #{tpu_custom_call.1} parent=1 // pred_check
      _
    $region19: #{tpu_custom_call.1} parent=1 // pred_check_branch
      %43 = sbr.rel (0) target = $region21
    $region20: #{tpu_custom_call.1} parent=1 // pred_region
      %s45 = ssub.s32 256, 256
      %46 = vsyncadd [#allocation9], %s45
      %s47 = sshll.u32 [#allocation10], 4
      %s48 = int_to_ptr.vmem [resolvable:$true] %s47
      %53 = dma.hbm_to_vmem [thread:$0]  %s4, 256, %s48, [#allocation9], 64, 64, 4
    $region21: #{tpu_custom_call.1} parent=1 // pred_fallthru
      _
    // Predicated region
    $region22: #{tpu_custom_call.1} parent=1 // pred_check
      _
    $region23: #{tpu_custom_call.1} parent=1 // pred_check_branch
      %55 = sbr.rel (0) target = $region25
    $region24: #{tpu_custom_call.1} parent=1 // pred_region
      _
    $region25: #{tpu_custom_call.1} parent=1 // pred_fallthru
      _
    // Predicated region
    $region26: #{tpu_custom_call.1} parent=1 // pred_check
      _
    $region27: #{tpu_custom_call.1} parent=1 // pred_check_branch
      %57 = sbr.rel (0) target = $region29
    $region28: #{tpu_custom_call.1} parent=1 // pred_region
      %58 = dma.done [#allocation6], 512
    $region29: #{tpu_custom_call.1} parent=1 // pred_fallthru
      _
    // Predicated region
    $region30: #{tpu_custom_call.1} parent=1 // pred_check
      _
    $region31: #{tpu_custom_call.1} parent=1 // pred_check_branch
      %60 = sbr.rel (0) target = $region33
    $region32: #{tpu_custom_call.1} parent=1 // pred_region
      %61 = dma.done [#allocation9], 2048
    $region33: #{tpu_custom_call.1} parent=1 // pred_fallthru
      _
    // Predicated region
    $region34: #{tpu_custom_call.1} parent=1 // pred_check
      _
    $region35: #{tpu_custom_call.1} parent=1 // pred_check_branch
      %63 = sbr.rel (0) target = $region37
    $region36: #{tpu_custom_call.1} parent=1 // pred_region
      %64 = dma.done [#allocation9], 256
    $region37: #{tpu_custom_call.1} parent=1 // pred_fallthru
      _
    %v66 = vld [vmem:[#allocation5] sm:$0xf]
    %v67 = vld [vmem:[#allocation5 + $0x4] sm:$0xf]
    %v68 = vld [vmem:[#allocation5 + $0x8] sm:$0xf]
    %v69 = vld [vmem:[#allocation5 + $0xc] sm:$0xf]
    %v70 = vld [vmem:[#allocation5 + $0x10] sm:$0xf]
    %v71 = vld [vmem:[#allocation5 + $0x14] sm:$0xf]
    %v72 = vld [vmem:[#allocation5 + $0x18] sm:$0xf]
    %v73 = vld [vmem:[#allocation5 + $0x1c] sm:$0xf]
    %v74 = vld [vmem:[#allocation8] sm:$0xff]
    %v75 = vld [vmem:[#allocation8 + $0x8] sm:$0xff]
    %v76 = vld [vmem:[#allocation8 + $0x10] sm:$0xff]
    %v77 = vld [vmem:[#allocation8 + $0x18] sm:$0xff]
    %v78 = vld [vmem:[#allocation8 + $0x20] sm:$0xff]
    %v79 = vld [vmem:[#allocation8 + $0x28] sm:$0xff]
    %v80 = vld [vmem:[#allocation8 + $0x30] sm:$0xff]
    %v81 = vld [vmem:[#allocation8 + $0x38] sm:$0xff]
    %v82 = vld [vmem:[#allocation8 + $0x40] sm:$0xff]
    %v83 = vld [vmem:[#allocation8 + $0x48] sm:$0xff]
    %v84 = vld [vmem:[#allocation8 + $0x50] sm:$0xff]
    %v85 = vld [vmem:[#allocation8 + $0x58] sm:$0xff]
    %v86 = vld [vmem:[#allocation8 + $0x60] sm:$0xff]
    %v87 = vld [vmem:[#allocation8 + $0x68] sm:$0xff]
    %v88 = vld [vmem:[#allocation8 + $0x70] sm:$0xff]
    %v89 = vld [vmem:[#allocation8 + $0x78] sm:$0xff]
    %v90 = vld [vmem:[%s5] sm:$0x3]
    %v92 = vlaneseq
    %v93 = vshrl.u32 %v92, 7
    %v94 = vsub.s32 0, %v93
    %v95 = vrot.slane %v90, %v94
    %v96 = vlaneseq
    %v97 = vshrl.u32 %v96, 7
    %v98 = vsub.s32 1, %v97
    %v99 = vrot.slane %v90, %v98
    %v110 = vunpack.c.l.b16 %v66
    %v111 = vunpack.c.l.b16 %v67
    %v112 = vunpack.c.l.b16 %v68
    %v113 = vunpack.c.l.b16 %v69
    %v114 = vunpack.c.l.b16 %v70
    %v115 = vunpack.c.l.b16 %v71
    %v116 = vunpack.c.l.b16 %v72
    %v117 = vunpack.c.l.b16 %v73
    %v118 = vpack.c.b16 %v111, %v110
    %v119 = vpack.c.b16 %v113, %v112
    %v120 = vpack.c.b16 %v115, %v114
    %v121 = vpack.c.b16 %v117, %v116
    %v142 = vunpack.c.l.b16 %v74
    %v143 = vunpack.c.h.b16 %v74
    %v144 = vunpack.c.l.b16 %v75
    %v145 = vunpack.c.h.b16 %v75
    %v146 = vunpack.c.l.b16 %v76
    %v147 = vunpack.c.h.b16 %v76
    %v148 = vunpack.c.l.b16 %v77
    %v149 = vunpack.c.h.b16 %v77
    %v150 = vunpack.c.l.b16 %v78
    %v151 = vunpack.c.h.b16 %v78
    %v152 = vunpack.c.l.b16 %v79
    %v153 = vunpack.c.h.b16 %v79
    %v154 = vunpack.c.l.b16 %v80
    %v155 = vunpack.c.h.b16 %v80
    %v156 = vunpack.c.l.b16 %v81
    %v157 = vunpack.c.h.b16 %v81
    %v158 = vunpack.c.l.b16 %v82
    %v159 = vunpack.c.h.b16 %v82
    %v160 = vunpack.c.l.b16 %v83
    %v161 = vunpack.c.h.b16 %v83
    %v162 = vunpack.c.l.b16 %v84
    %v163 = vunpack.c.h.b16 %v84
    %v164 = vunpack.c.l.b16 %v85
    %v165 = vunpack.c.h.b16 %v85
    %v166 = vunpack.c.l.b16 %v86
    %v167 = vunpack.c.h.b16 %v86
    %v168 = vunpack.c.l.b16 %v87
    %v169 = vunpack.c.h.b16 %v87
    %v170 = vunpack.c.l.b16 %v88
    %v171 = vunpack.c.h.b16 %v88
    %v172 = vunpack.c.l.b16 %v89
    %v173 = vunpack.c.h.b16 %v89
    %v174 = vpack.c.b16 %v144, %v142
    %v175 = vpack.c.b16 %v145, %v143
    %v176 = vpack.c.b16 %v148, %v146
    %v177 = vpack.c.b16 %v149, %v147
    %v178 = vpack.c.b16 %v152, %v150
    %v179 = vpack.c.b16 %v153, %v151
    %v180 = vpack.c.b16 %v156, %v154
    %v181 = vpack.c.b16 %v157, %v155
    %v182 = vpack.c.b16 %v160, %v158
    %v183 = vpack.c.b16 %v161, %v159
    %v184 = vpack.c.b16 %v164, %v162
    %v185 = vpack.c.b16 %v165, %v163
    %v186 = vpack.c.b16 %v168, %v166
    %v187 = vpack.c.b16 %v169, %v167
    %v188 = vpack.c.b16 %v172, %v170
    %v189 = vpack.c.b16 %v173, %v171
    %206 = vmatprep.subr.bf16.mxu0 %v175
    %207 = vmatpush1.bf16.msra.mxu0 %v174
    %208 = vmatprep.subr.bf16.mxu0 %v177
    %209 = vmatpush1.bf16.msra.mxu0 %v176
    %210 = vmatprep.subr.bf16.mxu0 %v179
    %211 = vmatpush1.bf16.msra.mxu0 %v178
    %212 = vmatprep.subr.bf16.mxu0 %v181
    %213 = vmatpush1.bf16.msra.mxu0 %v180
    %214 = vmatprep.subr.bf16.mxu0 %v183
    %215 = vmatpush1.bf16.msra.mxu0 %v182
    %216 = vmatprep.subr.bf16.mxu0 %v185
    %217 = vmatpush1.bf16.msra.mxu0 %v184
    %218 = vmatprep.subr.bf16.mxu0 %v187
    %219 = vmatpush1.bf16.msra.mxu0 %v186
    %220 = vmatprep.subr.bf16.mxu0 %v189
    %221 = vmatpush1.bf16.msra.mxu0 %v188
    %222 = vmatprep.subr.bf16.mxu0 0
    %223 = vmatpush1.bf16.msra.mxu0 0
    %224 = vmatprep.subr.bf16.mxu0 0
    %225 = vmatpush1.bf16.msra.mxu0 0
    %226 = vmatprep.subr.bf16.mxu0 0
    %227 = vmatpush1.bf16.msra.mxu0 0
    %228 = vmatprep.subr.bf16.mxu0 0
    %229 = vmatpush1.bf16.msra.mxu0 0
    %230 = vmatprep.subr.bf16.mxu0 0
    %231 = vmatpush1.bf16.msra.mxu0 0
    %232 = vmatprep.subr.bf16.mxu0 0
    %233 = vmatpush1.bf16.msra.mxu0 0
    %234 = vmatprep.subr.bf16.mxu0 0
    %235 = vmatpush1.bf16.msra.mxu0 0
    %236 = vmatprep.subr.bf16.mxu0 0
    %237 = vmatpush1.bf16.msra.mxu0 0
    %238 = vmatprep.mubr.bf16.mxu0 0
    %239 = vmatmul.mubr.bf16.gmra.mrb[0].mxu0 %v118
    %v240 = vpop.f32.mrb[0].mxu0
    %v241 = vadd.f32 %v95, %v240
    %v242 = vpop.f32.mrb[0].mxu0
    %v243 = vadd.f32 %v99, %v242
    %v244 = vpop.f32.mrb[0].mxu0
    %v245 = vadd.f32 %v95, %v244
    %v246 = vpop.f32.mrb[0].mxu0
    %v247 = vadd.f32 %v99, %v246
    %248 = vmatprep.mubr.bf16.mxu0 0
    %249 = vmatmul.mubr.bf16.gmra.mrb[0].mxu0 %v119
    %v250 = vpop.f32.mrb[0].mxu0
    %v251 = vadd.f32 %v95, %v250
    %v252 = vpop.f32.mrb[0].mxu0
    %v253 = vadd.f32 %v99, %v252
    %v254 = vpop.f32.mrb[0].mxu0
    %v255 = vadd.f32 %v95, %v254
    %v256 = vpop.f32.mrb[0].mxu0
    %v257 = vadd.f32 %v99, %v256
    %258 = vmatprep.mubr.bf16.mxu0 0
    %259 = vmatmul.mubr.bf16.gmra.mrb[0].mxu0 %v120
    %v260 = vpop.f32.mrb[0].mxu0
    %v261 = vadd.f32 %v95, %v260
    %v262 = vpop.f32.mrb[0].mxu0
    %v263 = vadd.f32 %v99, %v262
    %v264 = vpop.f32.mrb[0].mxu0
    %v265 = vadd.f32 %v95, %v264
    %v266 = vpop.f32.mrb[0].mxu0
    %v267 = vadd.f32 %v99, %v266
    %268 = vmatprep.mubr.bf16.mxu0 0
    %269 = vmatmul.mubr.bf16.gmra.mrb[0].mxu0 %v121
    %v270 = vpop.f32.mrb[0].mxu0
    %v271 = vadd.f32 %v95, %v270
    %v272 = vpop.f32.mrb[0].mxu0
    %v273 = vadd.f32 %v99, %v272
    %v274 = vpop.f32.mrb[0].mxu0
    %v275 = vadd.f32 %v95, %v274
    %v276 = vpop.f32.mrb[0].mxu0
    %v277 = vadd.f32 %v99, %v276
    %278 = vdwg.mxu0
    %279 = vst [vmem:[#allocation2] sm:$0xff] %v241
    %280 = vst [vmem:[#allocation2 + $0x8] sm:$0xff] %v243
    %281 = vst [vmem:[#allocation2 + $0x10] sm:$0xff] %v245
    %282 = vst [vmem:[#allocation2 + $0x18] sm:$0xff] %v247
    %283 = vst [vmem:[#allocation2 + $0x20] sm:$0xff] %v251
    %284 = vst [vmem:[#allocation2 + $0x28] sm:$0xff] %v253
    %285 = vst [vmem:[#allocation2 + $0x30] sm:$0xff] %v255
    %286 = vst [vmem:[#allocation2 + $0x38] sm:$0xff] %v257
    %287 = vst [vmem:[#allocation2 + $0x40] sm:$0xff] %v261
    %288 = vst [vmem:[#allocation2 + $0x48] sm:$0xff] %v263
    %289 = vst [vmem:[#allocation2 + $0x50] sm:$0xff] %v265
    %290 = vst [vmem:[#allocation2 + $0x58] sm:$0xff] %v267
    %291 = vst [vmem:[#allocation2 + $0x60] sm:$0xff] %v271
    %292 = vst [vmem:[#allocation2 + $0x68] sm:$0xff] %v273
    %293 = vst [vmem:[#allocation2 + $0x70] sm:$0xff] %v275
    %294 = vst [vmem:[#allocation2 + $0x78] sm:$0xff] %v277
    %v295 = vld [vmem:[%s1] sm:$0xff]
    %v296 = vld [vmem:[%s3] sm:$0xf]
    %v297 = vld [vmem:[%s3 + $0x4] sm:$0xf]
    %v298 = vld [vmem:[%s3 + $0x8] sm:$0xf]
    %v299 = vld [vmem:[%s3 + $0xc] sm:$0xf]
    %v300 = vld [vmem:[#allocation10] sm:$0xf]
    %v301 = vld [vmem:[#allocation10 + $0x4] sm:$0xf]
    %v302 = vld [vmem:[#allocation10 + $0x8] sm:$0xf]
    %v303 = vld [vmem:[#allocation10 + $0xc] sm:$0xf]
    %v304 = vld [vmem:[#allocation2] sm:$0xff]
    %s305 = scalar_lea.vmem [#allocation2], 112
    %v306 = vld [vmem:[%s305 + $0x8] sm:$0xff]
    %vm307 = vcmp.gt.s32.totalorder %v295, 0
    %vm308 = vcmp.gt.s32.totalorder %v295, 7
    %v313 = vunpack.c.l.b16 %v296
    %v314 = vunpack.c.l.b16 %v297
    %v315 = vunpack.c.l.b16 %v298
    %v316 = vunpack.c.l.b16 %v299
    %v317 = vpack.c.b16 %v314, %v313
    %v318 = vpack.c.b16 %v316, %v315
    %vm321 = vcmask 261120
    %v323 = vsel %vm321, 0, 0
    %325 = vmatprep.subr.bf16.mxu0 0
    %326 = vmatpush1.bf16.msra.mxu0 %v317
    %327 = vmatprep.subr.bf16.mxu0 0
    %328 = vmatpush1.bf16.msra.mxu0 %v318
    %329 = vmatprep.subr.bf16.mxu0 0
    %330 = vmatpush1.bf16.msra.mxu0 0
    %331 = vmatprep.subr.bf16.mxu0 0
    %332 = vmatpush1.bf16.msra.mxu0 0
    %333 = vmatprep.subr.bf16.mxu0 0
    %334 = vmatpush1.bf16.msra.mxu0 0
    %335 = vmatprep.subr.bf16.mxu0 0
    %336 = vmatpush1.bf16.msra.mxu0 0
    %337 = vmatprep.subr.bf16.mxu0 0
    %338 = vmatpush1.bf16.msra.mxu0 0
    %339 = vmatprep.subr.bf16.mxu0 0
    %340 = vmatpush1.bf16.msra.mxu0 0
    %341 = vmatprep.subr.bf16.mxu0 0
    %342 = vmatpush1.bf16.msra.mxu0 0
    %343 = vmatprep.subr.bf16.mxu0 0
    %344 = vmatpush1.bf16.msra.mxu0 0
    %345 = vmatprep.subr.bf16.mxu0 0
    %346 = vmatpush1.bf16.msra.mxu0 0
    %347 = vmatprep.subr.bf16.mxu0 0
    %348 = vmatpush1.bf16.msra.mxu0 0
    %349 = vmatprep.subr.bf16.mxu0 0
    %350 = vmatpush1.bf16.msra.mxu0 0
    %351 = vmatprep.subr.bf16.mxu0 0
    %352 = vmatpush1.bf16.msra.mxu0 0
    %353 = vmatprep.subr.bf16.mxu0 0
    %354 = vmatpush1.bf16.msra.mxu0 0
    %355 = vmatprep.subr.bf16.mxu0 0
    %356 = vmatpush1.bf16.msra.mxu0 0
    %357 = vmatprep.mubr.bf16.mxu0 0
    %358 = vmatmul.mubr.bf16.gmra.mrb[0].mxu0 %v323
    %v359 = vpop.f32.mrb[0].mxu0
    %v360 = vadd.f32 0.0, %v359
    %v361 = vpop.f32.mrb[0].mxu0
    %v362 = vpop.f32.mrb[0].mxu0
    %v363 = vpop.f32.mrb[0].mxu0
    %364 = vdwg.mxu0
    %v365 = vadd.f32 %v304, %v360
    %v366 = vxor.u32 %v365, 2147483648
    %v367 = vmul.f32 %v366, 1.442695
    %v368 = vpow.pop %v367
    %v369 = vadd.f32 %v368, 1.0
    %v370 = vrcp.pop %v369
    %v371 = vmul.f32 1.0, %v370
    %v372 = vtanh.pop %v365
    %v373 = vmul.f32 %v371, 0.0
    %375 = vrot.lane.b32.xlu0 %v372, 64
    %v376 = vpop.permute.xlu0 %375
    %v378 = vmul.f32 %v371, %v376
    %380 = vrot.lane.b32.xlu0 %v378, 32
    %v381 = vpop.permute.xlu0 %380
    %v383 = vadd.f32 %v373, %v381
    %v384 = vtanh.pop %v383
    %386 = vrot.lane.b32.xlu0 %v384, 64
    %v387 = vpop.permute.xlu0 %386
    %v389 = vmul.f32 %v371, %v387
    %v390 = vsel %vm307, 1, 0
    %391 = vset.pattern.permute.xlu0 0
    %392 = vperm.xlu0 %391, %v390
    %v393 = vpop.permute.xlu0 %392
    %vm394 = vcmp.eq.s32.totalorder %v393, 1
    %v395 = vsel %vm394, %v383, 0.0
    %v396 = vsel %vm394, %v389, 0.0
    %v401 = vunpack.c.l.b16 %v300
    %v402 = vunpack.c.l.b16 %v301
    %v403 = vunpack.c.l.b16 %v302
    %v404 = vunpack.c.l.b16 %v303
    %v405 = vpack.c.b16 %v402, %v401
    %v406 = vpack.c.b16 %v404, %v403
    %409 = vmatprep.subr.bf16.mxu0 0
    %410 = vmatpush1.bf16.msra.mxu0 %v405
    %411 = vmatprep.subr.bf16.mxu0 0
    %412 = vmatpush1.bf16.msra.mxu0 %v406
    %413 = vmatprep.subr.bf16.mxu0 0
    %414 = vmatpush1.bf16.msra.mxu0 0
    %415 = vmatprep.subr.bf16.mxu0 0
    %416 = vmatpush1.bf16.msra.mxu0 0
    %417 = vmatprep.subr.bf16.mxu0 0
    %418 = vmatpush1.bf16.msra.mxu0 0
    %419 = vmatprep.subr.bf16.mxu0 0
    %420 = vmatpush1.bf16.msra.mxu0 0
    %421 = vmatprep.subr.bf16.mxu0 0
    %422 = vmatpush1.bf16.msra.mxu0 0
    %423 = vmatprep.subr.bf16.mxu0 0
    %424 = vmatpush1.bf16.msra.mxu0 0
    %425 = vmatprep.subr.bf16.mxu0 0
    %426 = vmatpush1.bf16.msra.mxu0 0
    %427 = vmatprep.subr.bf16.mxu0 0
    %428 = vmatpush1.bf16.msra.mxu0 0
    %429 = vmatprep.subr.bf16.mxu0 0
    %430 = vmatpush1.bf16.msra.mxu0 0
    %431 = vmatprep.subr.bf16.mxu0 0
    %432 = vmatpush1.bf16.msra.mxu0 0
    %433 = vmatprep.subr.bf16.mxu0 0
    %434 = vmatpush1.bf16.msra.mxu0 0
    %435 = vmatprep.subr.bf16.mxu0 0
    %436 = vmatpush1.bf16.msra.mxu0 0
    %437 = vmatprep.subr.bf16.mxu0 0
    %438 = vmatpush1.bf16.msra.mxu0 0
    %439 = vmatprep.subr.bf16.mxu0 0
    %440 = vmatpush1.bf16.msra.mxu0 0
    %441 = vmatprep.mubr.bf16.mxu0 0
    %442 = vmatmul.mubr.bf16.gmra.mrb[0].mxu0 %v323
    %v443 = vpop.f32.mrb[0].mxu0
    %v444 = vadd.f32 0.0, %v443
    %v445 = vpop.f32.mrb[0].mxu0
    %v446 = vpop.f32.mrb[0].mxu0
    %v447 = vpop.f32.mrb[0].mxu0
    %448 = vdwg.mxu0
    %v449 = vadd.f32 %v306, %v444
    %v450 = vxor.u32 %v449, 2147483648
    %v451 = vmul.f32 %v450, 1.442695
    %v452 = vpow.pop %v451
    %v453 = vadd.f32 %v452, 1.0
    %v454 = vrcp.pop %v453
    %v455 = vmul.f32 1.0, %v454
    %v456 = vtanh.pop %v449
    %v457 = vmul.f32 %v455, 0.0
    %459 = vrot.lane.b32.xlu0 %v456, 64
    %v460 = vpop.permute.xlu0 %459
    %v462 = vmul.f32 %v455, %v460
    %464 = vrot.lane.b32.xlu0 %v462, 32
    %v465 = vpop.permute.xlu0 %464
    %v467 = vadd.f32 %v457, %v465
    %v468 = vtanh.pop %v467
    %470 = vrot.lane.b32.xlu0 %v468, 64
    %v471 = vpop.permute.xlu0 %470
    %v473 = vmul.f32 %v455, %v471
    %v474 = vsel %vm308, 1, 0
    %475 = vset.pattern.permute.xlu0 0
    %476 = vperm.xlu0 %475, %v474
    %v477 = vpop.permute.xlu0 %476
    %vm478 = vcmp.eq.s32.totalorder %v477, 1
    %v479 = vsel %vm478, %v467, 0.0
    %v480 = vsel %vm478, %v473, 0.0
    %482 = vrot.lane.b32.xlu0 %v396, 32
    %v483 = vpop.permute.xlu0 %482
    %485 = vst.msk [vmem:[#allocation3] sm:$0xff] %vm321, %v483
    %487 = vrot.lane.b32.xlu0 %v480, 32
    %v488 = vpop.permute.xlu0 %487
    %s490 = scalar_lea.vmem [#allocation4], 56
    %491 = vst.msk [vmem:[%s490] sm:$0xff] %vm321, %v488
    %s492 = scalar_lea.vmem [#allocation2], 16
    %v493 = vld [vmem:[%s492] sm:$0xff]
    %s494 = scalar_lea.vmem [#allocation2], 96
    %v495 = vld [vmem:[%s494 + $0x8] sm:$0xff]
    %vm496 = vcmp.gt.s32.totalorder %v295, 1
    %vm497 = vcmp.gt.s32.totalorder %v295, 6
    %v498 = vpack.c.bf16 %v396, %v396
    %500 = vrot.lane.b32.xlu0 %v498, 32
    %v501 = vpop.permute.xlu0 %500
    %v503 = vsel %vm321, %v501, 0
    %505 = vmatprep.subr.bf16.mxu0 0
    %506 = vmatpush1.bf16.msra.mxu0 %v317
    %507 = vmatprep.subr.bf16.mxu0 0
    %508 = vmatpush1.bf16.msra.mxu0 %v318
    %509 = vmatprep.subr.bf16.mxu0 0
    %510 = vmatpush1.bf16.msra.mxu0 0
    %511 = vmatprep.subr.bf16.mxu0 0
    %512 = vmatpush1.bf16.msra.mxu0 0
    %513 = vmatprep.subr.bf16.mxu0 0
    %514 = vmatpush1.bf16.msra.mxu0 0
    %515 = vmatprep.subr.bf16.mxu0 0
    %516 = vmatpush1.bf16.msra.mxu0 0
    %517 = vmatprep.subr.bf16.mxu0 0
    %518 = vmatpush1.bf16.msra.mxu0 0
    %519 = vmatprep.subr.bf16.mxu0 0
    %520 = vmatpush1.bf16.msra.mxu0 0
    %521 = vmatprep.subr.bf16.mxu0 0
    %522 = vmatpush1.bf16.msra.mxu0 0
    %523 = vmatprep.subr.bf16.mxu0 0
    %524 = vmatpush1.bf16.msra.mxu0 0
    %525 = vmatprep.subr.bf16.mxu0 0
    %526 = vmatpush1.bf16.msra.mxu0 0
    %527 = vmatprep.subr.bf16.mxu0 0
    %528 = vmatpush1.bf16.msra.mxu0 0
    %529 = vmatprep.subr.bf16.mxu0 0
    %530 = vmatpush1.bf16.msra.mxu0 0
    %531 = vmatprep.subr.bf16.mxu0 0
    %532 = vmatpush1.bf16.msra.mxu0 0
    %533 = vmatprep.subr.bf16.mxu0 0
    %534 = vmatpush1.bf16.msra.mxu0 0
    %535 = vmatprep.subr.bf16.mxu0 0
    %536 = vmatpush1.bf16.msra.mxu0 0
    %537 = vmatprep.mubr.bf16.mxu0 0
    %538 = vmatmul.mubr.bf16.gmra.mrb[0].mxu0 %v503
    %v539 = vpop.f32.mrb[0].mxu0
    %v540 = vadd.f32 0.0, %v539
    %v541 = vpop.f32.mrb[0].mxu0
    %v542 = vpop.f32.mrb[0].mxu0
    %v543 = vpop.f32.mrb[0].mxu0
    %544 = vdwg.mxu0
    %v545 = vadd.f32 %v493, %v540
    %v546 = vxor.u32 %v545, 2147483648
    %v547 = vmul.f32 %v546, 1.442695
    %v548 = vpow.pop %v547
    %v549 = vadd.f32 %v548, 1.0
    %v550 = vrcp.pop %v549
    %v551 = vmul.f32 1.0, %v550
    %v552 = vtanh.pop %v545
    %v553 = vmul.f32 %v551, %v395
    %555 = vrot.lane.b32.xlu0 %v552, 64
    %v556 = vpop.permute.xlu0 %555
    %v558 = vmul.f32 %v551, %v556
    %560 = vrot.lane.b32.xlu0 %v558, 32
    %v561 = vpop.permute.xlu0 %560
    %v563 = vadd.f32 %v553, %v561
    %v564 = vtanh.pop %v563
    %566 = vrot.lane.b32.xlu0 %v564, 64
    %v567 = vpop.permute.xlu0 %566
    %v569 = vmul.f32 %v551, %v567
    %v570 = vsel %vm496, 1, 0
    %571 = vset.pattern.permute.xlu0 0
    %572 = vperm.xlu0 %571, %v570
    %v573 = vpop.permute.xlu0 %572
    %vm574 = vcmp.eq.s32.totalorder %v573, 1
    %v575 = vsel %vm574, %v563, %v395
    %v576 = vsel %vm574, %v569, %v396
    %v577 = vsel %vm574, %v569, 0.0
    %v578 = vpack.c.bf16 %v480, %v480
    %580 = vrot.lane.b32.xlu0 %v578, 32
    %v581 = vpop.permute.xlu0 %580
    %v583 = vsel %vm321, %v581, 0
    %585 = vmatprep.subr.bf16.mxu0 0
    %586 = vmatpush1.bf16.msra.mxu0 %v405
    %587 = vmatprep.subr.bf16.mxu0 0
    %588 = vmatpush1.bf16.msra.mxu0 %v406
    %589 = vmatprep.subr.bf16.mxu0 0
    %590 = vmatpush1.bf16.msra.mxu0 0
    %591 = vmatprep.subr.bf16.mxu0 0
    %592 = vmatpush1.bf16.msra.mxu0 0
    %593 = vmatprep.subr.bf16.mxu0 0
    %594 = vmatpush1.bf16.msra.mxu0 0
    %595 = vmatprep.subr.bf16.mxu0 0
    %596 = vmatpush1.bf16.msra.mxu0 0
    %597 = vmatprep.subr.bf16.mxu0 0
    %598 = vmatpush1.bf16.msra.mxu0 0
    %599 = vmatprep.subr.bf16.mxu0 0
    %600 = vmatpush1.bf16.msra.mxu0 0
    %601 = vmatprep.subr.bf16.mxu0 0
    %602 = vmatpush1.bf16.msra.mxu0 0
    %603 = vmatprep.subr.bf16.mxu0 0
    %604 = vmatpush1.bf16.msra.mxu0 0
    %605 = vmatprep.subr.bf16.mxu0 0
    %606 = vmatpush1.bf16.msra.mxu0 0
    %607 = vmatprep.subr.bf16.mxu0 0
    %608 = vmatpush1.bf16.msra.mxu0 0
    %609 = vmatprep.subr.bf16.mxu0 0
    %610 = vmatpush1.bf16.msra.mxu0 0
    %611 = vmatprep.subr.bf16.mxu0 0
    %612 = vmatpush1.bf16.msra.mxu0 0
    %613 = vmatprep.subr.bf16.mxu0 0
    %614 = vmatpush1.bf16.msra.mxu0 0
    %615 = vmatprep.subr.bf16.mxu0 0
    %616 = vmatpush1.bf16.msra.mxu0 0
    %617 = vmatprep.mubr.bf16.mxu0 0
    %618 = vmatmul.mubr.bf16.gmra.mrb[0].mxu0 %v583
    %v619 = vpop.f32.mrb[0].mxu0
    %v620 = vadd.f32 0.0, %v619
    %v621 = vpop.f32.mrb[0].mxu0
    %v622 = vpop.f32.mrb[0].mxu0
    %v623 = vpop.f32.mrb[0].mxu0
    %624 = vdwg.mxu0
    %v625 = vadd.f32 %v495, %v620
    %v626 = vxor.u32 %v625, 2147483648
    %v627 = vmul.f32 %v626, 1.442695
    %v628 = vpow.pop %v627
    %v629 = vadd.f32 %v628, 1.0
    %v630 = vrcp.pop %v629
    %v631 = vmul.f32 1.0, %v630
    %v632 = vtanh.pop %v625
    %v633 = vmul.f32 %v631, %v479
    %635 = vrot.lane.b32.xlu0 %v632, 64
    %v636 = vpop.permute.xlu0 %635
    %v638 = vmul.f32 %v631, %v636
    %640 = vrot.lane.b32.xlu0 %v638, 32
    %v641 = vpop.permute.xlu0 %640
    %v643 = vadd.f32 %v633, %v641
    %v644 = vtanh.pop %v643
    %646 = vrot.lane.b32.xlu0 %v644, 64
    %v647 = vpop.permute.xlu0 %646
    %v649 = vmul.f32 %v631, %v647
    %v650 = vsel %vm497, 1, 0
    %651 = vset.pattern.permute.xlu0 0
    %652 = vperm.xlu0 %651, %v650
    %v653 = vpop.permute.xlu0 %652
    %vm654 = vcmp.eq.s32.totalorder %v653, 1
    %v655 = vsel %vm654, %v643, %v479
    %v656 = vsel %vm654, %v649, %v480
    %v657 = vsel %vm654, %v649, 0.0
    %659 = vrot.lane.b32.xlu0 %v577, 32
    %v660 = vpop.permute.xlu0 %659
    %s662 = scalar_lea.vmem [#allocation3], 8
    %663 = vst.msk [vmem:[%s662] sm:$0xff] %vm321, %v660
    %665 = vrot.lane.b32.xlu0 %v657, 32
    %v666 = vpop.permute.xlu0 %665
    %s668 = scalar_lea.vmem [#allocation4], 48
    %669 = vst.msk [vmem:[%s668] sm:$0xff] %vm321, %v666
    %s670 = scalar_lea.vmem [#allocation2], 32
    %v671 = vld [vmem:[%s670] sm:$0xff]
    %s672 = scalar_lea.vmem [#allocation2], 80
    %v673 = vld [vmem:[%s672 + $0x8] sm:$0xff]
    %vm674 = vcmp.gt.s32.totalorder %v295, 2
    %vm675 = vcmp.gt.s32.totalorder %v295, 5
    %v676 = vpack.c.bf16 %v576, %v576
    %678 = vrot.lane.b32.xlu0 %v676, 32
    %v679 = vpop.permute.xlu0 %678
    %v681 = vsel %vm321, %v679, 0
    %683 = vmatprep.subr.bf16.mxu0 0
    %684 = vmatpush1.bf16.msra.mxu0 %v317
    %685 = vmatprep.subr.bf16.mxu0 0
    %686 = vmatpush1.bf16.msra.mxu0 %v318
    %687 = vmatprep.subr.bf16.mxu0 0
    %688 = vmatpush1.bf16.msra.mxu0 0
    %689 = vmatprep.subr.bf16.mxu0 0
    %690 = vmatpush1.bf16.msra.mxu0 0
    %691 = vmatprep.subr.bf16.mxu0 0
    %692 = vmatpush1.bf16.msra.mxu0 0
    %693 = vmatprep.subr.bf16.mxu0 0
    %694 = vmatpush1.bf16.msra.mxu0 0
    %695 = vmatprep.subr.bf16.mxu0 0
    %696 = vmatpush1.bf16.msra.mxu0 0
    %697 = vmatprep.subr.bf16.mxu0 0
    %698 = vmatpush1.bf16.msra.mxu0 0
    %699 = vmatprep.subr.bf16.mxu0 0
    %700 = vmatpush1.bf16.msra.mxu0 0
    %701 = vmatprep.subr.bf16.mxu0 0
    %702 = vmatpush1.bf16.msra.mxu0 0
    %703 = vmatprep.subr.bf16.mxu0 0
    %704 = vmatpush1.bf16.msra.mxu0 0
    %705 = vmatprep.subr.bf16.mxu0 0
    %706 = vmatpush1.bf16.msra.mxu0 0
    %707 = vmatprep.subr.bf16.mxu0 0
    %708 = vmatpush1.bf16.msra.mxu0 0
    %709 = vmatprep.subr.bf16.mxu0 0
    %710 = vmatpush1.bf16.msra.mxu0 0
    %711 = vmatprep.subr.bf16.mxu0 0
    %712 = vmatpush1.bf16.msra.mxu0 0
    %713 = vmatprep.subr.bf16.mxu0 0
    %714 = vmatpush1.bf16.msra.mxu0 0
    %715 = vmatprep.mubr.bf16.mxu0 0
    %716 = vmatmul.mubr.bf16.gmra.mrb[0].mxu0 %v681
    %v717 = vpop.f32.mrb[0].mxu0
    %v718 = vadd.f32 0.0, %v717
    %v719 = vpop.f32.mrb[0].mxu0
    %v720 = vpop.f32.mrb[0].mxu0
    %v721 = vpop.f32.mrb[0].mxu0
    %722 = vdwg.mxu0
    %v723 = vadd.f32 %v671, %v718
    %v724 = vxor.u32 %v723, 2147483648
    %v725 = vmul.f32 %v724, 1.442695
    %v726 = vpow.pop %v725
    %v727 = vadd.f32 %v726, 1.0
    %v728 = vrcp.pop %v727
    %v729 = vmul.f32 1.0, %v728
    %v730 = vtanh.pop %v723
    %v731 = vmul.f32 %v729, %v575
    %733 = vrot.lane.b32.xlu0 %v730, 64
    %v734 = vpop.permute.xlu0 %733
    %v736 = vmul.f32 %v729, %v734
    %738 = vrot.lane.b32.xlu0 %v736, 32
    %v739 = vpop.permute.xlu0 %738
    %v741 = vadd.f32 %v731, %v739
    %v742 = vtanh.pop %v741
    %744 = vrot.lane.b32.xlu0 %v742, 64
    %v745 = vpop.permute.xlu0 %744
    %v747 = vmul.f32 %v729, %v745
    %v748 = vsel %vm674, 1, 0
    %749 = vset.pattern.permute.xlu0 0
    %750 = vperm.xlu0 %749, %v748
    %v751 = vpop.permute.xlu0 %750
    %vm752 = vcmp.eq.s32.totalorder %v751, 1
    %v753 = vsel %vm752, %v741, %v575
    %v754 = vsel %vm752, %v747, %v576
    %v755 = vsel %vm752, %v747, 0.0
    %v756 = vpack.c.bf16 %v656, %v656
    %758 = vrot.lane.b32.xlu0 %v756, 32
    %v759 = vpop.permute.xlu0 %758
    %v761 = vsel %vm321, %v759, 0
    %763 = vmatprep.subr.bf16.mxu0 0
    %764 = vmatpush1.bf16.msra.mxu0 %v405
    %765 = vmatprep.subr.bf16.mxu0 0
    %766 = vmatpush1.bf16.msra.mxu0 %v406
    %767 = vmatprep.subr.bf16.mxu0 0
    %768 = vmatpush1.bf16.msra.mxu0 0
    %769 = vmatprep.subr.bf16.mxu0 0
    %770 = vmatpush1.bf16.msra.mxu0 0
    %771 = vmatprep.subr.bf16.mxu0 0
    %772 = vmatpush1.bf16.msra.mxu0 0
    %773 = vmatprep.subr.bf16.mxu0 0
    %774 = vmatpush1.bf16.msra.mxu0 0
    %775 = vmatprep.subr.bf16.mxu0 0
    %776 = vmatpush1.bf16.msra.mxu0 0
    %777 = vmatprep.subr.bf16.mxu0 0
    %778 = vmatpush1.bf16.msra.mxu0 0
    %779 = vmatprep.subr.bf16.mxu0 0
    %780 = vmatpush1.bf16.msra.mxu0 0
    %781 = vmatprep.subr.bf16.mxu0 0
    %782 = vmatpush1.bf16.msra.mxu0 0
    %783 = vmatprep.subr.bf16.mxu0 0
    %784 = vmatpush1.bf16.msra.mxu0 0
    %785 = vmatprep.subr.bf16.mxu0 0
    %786 = vmatpush1.bf16.msra.mxu0 0
    %787 = vmatprep.subr.bf16.mxu0 0
    %788 = vmatpush1.bf16.msra.mxu0 0
    %789 = vmatprep.subr.bf16.mxu0 0
    %790 = vmatpush1.bf16.msra.mxu0 0
    %791 = vmatprep.subr.bf16.mxu0 0
    %792 = vmatpush1.bf16.msra.mxu0 0
    %793 = vmatprep.subr.bf16.mxu0 0
    %794 = vmatpush1.bf16.msra.mxu0 0
    %795 = vmatprep.mubr.bf16.mxu0 0
    %796 = vmatmul.mubr.bf16.gmra.mrb[0].mxu0 %v761
    %v797 = vpop.f32.mrb[0].mxu0
    %v798 = vadd.f32 0.0, %v797
    %v799 = vpop.f32.mrb[0].mxu0
    %v800 = vpop.f32.mrb[0].mxu0
    %v801 = vpop.f32.mrb[0].mxu0
    %802 = vdwg.mxu0
    %v803 = vadd.f32 %v673, %v798
    %v804 = vxor.u32 %v803, 2147483648
    %v805 = vmul.f32 %v804, 1.442695
    %v806 = vpow.pop %v805
    %v807 = vadd.f32 %v806, 1.0
    %v808 = vrcp.pop %v807
    %v809 = vmul.f32 1.0, %v808
    %v810 = vtanh.pop %v803
    %v811 = vmul.f32 %v809, %v655
    %813 = vrot.lane.b32.xlu0 %v810, 64
    %v814 = vpop.permute.xlu0 %813
    %v816 = vmul.f32 %v809, %v814
    %818 = vrot.lane.b32.xlu0 %v816, 32
    %v819 = vpop.permute.xlu0 %818
    %v821 = vadd.f32 %v811, %v819
    %v822 = vtanh.pop %v821
    %824 = vrot.lane.b32.xlu0 %v822, 64
    %v825 = vpop.permute.xlu0 %824
    %v827 = vmul.f32 %v809, %v825
    %v828 = vsel %vm675, 1, 0
    %829 = vset.pattern.permute.xlu0 0
    %830 = vperm.xlu0 %829, %v828
    %v831 = vpop.permute.xlu0 %830
    %vm832 = vcmp.eq.s32.totalorder %v831, 1
    %v833 = vsel %vm832, %v821, %v655
    %v834 = vsel %vm832, %v827, %v656
    %v835 = vsel %vm832, %v827, 0.0
    %837 = vrot.lane.b32.xlu0 %v755, 32
    %v838 = vpop.permute.xlu0 %837
    %s840 = scalar_lea.vmem [#allocation3], 16
    %841 = vst.msk [vmem:[%s840] sm:$0xff] %vm321, %v838
    %843 = vrot.lane.b32.xlu0 %v835, 32
    %v844 = vpop.permute.xlu0 %843
    %s846 = scalar_lea.vmem [#allocation4], 40
    %847 = vst.msk [vmem:[%s846] sm:$0xff] %vm321, %v844
    %s848 = scalar_lea.vmem [#allocation2], 48
    %v849 = vld [vmem:[%s848] sm:$0xff]
    %s850 = scalar_lea.vmem [#allocation2], 64
    %v851 = vld [vmem:[%s850 + $0x8] sm:$0xff]
    %vm852 = vcmp.gt.s32.totalorder %v295, 3
    %vm853 = vcmp.gt.s32.totalorder %v295, 4
    %v854 = vpack.c.bf16 %v754, %v754
    %856 = vrot.lane.b32.xlu0 %v854, 32
    %v857 = vpop.permute.xlu0 %856
    %v859 = vsel %vm321, %v857, 0
    %861 = vmatprep.subr.bf16.mxu0 0
    %862 = vmatpush1.bf16.msra.mxu0 %v317
    %863 = vmatprep.subr.bf16.mxu0 0
    %864 = vmatpush1.bf16.msra.mxu0 %v318
    %865 = vmatprep.subr.bf16.mxu0 0
    %866 = vmatpush1.bf16.msra.mxu0 0
    %867 = vmatprep.subr.bf16.mxu0 0
    %868 = vmatpush1.bf16.msra.mxu0 0
    %869 = vmatprep.subr.bf16.mxu0 0
    %870 = vmatpush1.bf16.msra.mxu0 0
    %871 = vmatprep.subr.bf16.mxu0 0
    %872 = vmatpush1.bf16.msra.mxu0 0
    %873 = vmatprep.subr.bf16.mxu0 0
    %874 = vmatpush1.bf16.msra.mxu0 0
    %875 = vmatprep.subr.bf16.mxu0 0
    %876 = vmatpush1.bf16.msra.mxu0 0
    %877 = vmatprep.subr.bf16.mxu0 0
    %878 = vmatpush1.bf16.msra.mxu0 0
    %879 = vmatprep.subr.bf16.mxu0 0
    %880 = vmatpush1.bf16.msra.mxu0 0
    %881 = vmatprep.subr.bf16.mxu0 0
    %882 = vmatpush1.bf16.msra.mxu0 0
    %883 = vmatprep.subr.bf16.mxu0 0
    %884 = vmatpush1.bf16.msra.mxu0 0
    %885 = vmatprep.subr.bf16.mxu0 0
    %886 = vmatpush1.bf16.msra.mxu0 0
    %887 = vmatprep.subr.bf16.mxu0 0
    %888 = vmatpush1.bf16.msra.mxu0 0
    %889 = vmatprep.subr.bf16.mxu0 0
    %890 = vmatpush1.bf16.msra.mxu0 0
    %891 = vmatprep.subr.bf16.mxu0 0
    %892 = vmatpush1.bf16.msra.mxu0 0
    %893 = vmatprep.mubr.bf16.mxu0 0
    %894 = vmatmul.mubr.bf16.gmra.mrb[0].mxu0 %v859
    %v895 = vpop.f32.mrb[0].mxu0
    %v896 = vadd.f32 0.0, %v895
    %v897 = vpop.f32.mrb[0].mxu0
    %v898 = vpop.f32.mrb[0].mxu0
    %v899 = vpop.f32.mrb[0].mxu0
    %900 = vdwg.mxu0
    %v901 = vadd.f32 %v849, %v896
    %v902 = vxor.u32 %v901, 2147483648
    %v903 = vmul.f32 %v902, 1.442695
    %v904 = vpow.pop %v903
    %v905 = vadd.f32 %v904, 1.0
    %v906 = vrcp.pop %v905
    %v907 = vmul.f32 1.0, %v906
    %v908 = vtanh.pop %v901
    %v909 = vmul.f32 %v907, %v753
    %911 = vrot.lane.b32.xlu0 %v908, 64
    %v912 = vpop.permute.xlu0 %911
    %v914 = vmul.f32 %v907, %v912
    %916 = vrot.lane.b32.xlu0 %v914, 32
    %v917 = vpop.permute.xlu0 %916
    %v919 = vadd.f32 %v909, %v917
    %v920 = vtanh.pop %v919
    %922 = vrot.lane.b32.xlu0 %v920, 64
    %v923 = vpop.permute.xlu0 %922
    %v925 = vmul.f32 %v907, %v923
    %v926 = vsel %vm852, 1, 0
    %927 = vset.pattern.permute.xlu0 0
    %928 = vperm.xlu0 %927, %v926
    %v929 = vpop.permute.xlu0 %928
    %vm930 = vcmp.eq.s32.totalorder %v929, 1
    %v931 = vsel %vm930, %v919, %v753
    %v932 = vsel %vm930, %v925, %v754
    %v933 = vsel %vm930, %v925, 0.0
    %v934 = vpack.c.bf16 %v834, %v834
    %936 = vrot.lane.b32.xlu0 %v934, 32
    %v937 = vpop.permute.xlu0 %936
    %v939 = vsel %vm321, %v937, 0
    %941 = vmatprep.subr.bf16.mxu0 0
    %942 = vmatpush1.bf16.msra.mxu0 %v405
    %943 = vmatprep.subr.bf16.mxu0 0
    %944 = vmatpush1.bf16.msra.mxu0 %v406
    %945 = vmatprep.subr.bf16.mxu0 0
    %946 = vmatpush1.bf16.msra.mxu0 0
    %947 = vmatprep.subr.bf16.mxu0 0
    %948 = vmatpush1.bf16.msra.mxu0 0
    %949 = vmatprep.subr.bf16.mxu0 0
    %950 = vmatpush1.bf16.msra.mxu0 0
    %951 = vmatprep.subr.bf16.mxu0 0
    %952 = vmatpush1.bf16.msra.mxu0 0
    %953 = vmatprep.subr.bf16.mxu0 0
    %954 = vmatpush1.bf16.msra.mxu0 0
    %955 = vmatprep.subr.bf16.mxu0 0
    %956 = vmatpush1.bf16.msra.mxu0 0
    %957 = vmatprep.subr.bf16.mxu0 0
    %958 = vmatpush1.bf16.msra.mxu0 0
    %959 = vmatprep.subr.bf16.mxu0 0
    %960 = vmatpush1.bf16.msra.mxu0 0
    %961 = vmatprep.subr.bf16.mxu0 0
    %962 = vmatpush1.bf16.msra.mxu0 0
    %963 = vmatprep.subr.bf16.mxu0 0
    %964 = vmatpush1.bf16.msra.mxu0 0
    %965 = vmatprep.subr.bf16.mxu0 0
    %966 = vmatpush1.bf16.msra.mxu0 0
    %967 = vmatprep.subr.bf16.mxu0 0
    %968 = vmatpush1.bf16.msra.mxu0 0
    %969 = vmatprep.subr.bf16.mxu0 0
    %970 = vmatpush1.bf16.msra.mxu0 0
    %971 = vmatprep.subr.bf16.mxu0 0
    %972 = vmatpush1.bf16.msra.mxu0 0
    %973 = vmatprep.mubr.bf16.mxu0 0
    %974 = vmatmul.mubr.bf16.gmra.mrb[0].mxu0 %v939
    %v975 = vpop.f32.mrb[0].mxu0
    %v976 = vadd.f32 0.0, %v975
    %v977 = vpop.f32.mrb[0].mxu0
    %v978 = vpop.f32.mrb[0].mxu0
    %v979 = vpop.f32.mrb[0].mxu0
    %980 = vdwg.mxu0
    %v981 = vadd.f32 %v851, %v976
    %v982 = vxor.u32 %v981, 2147483648
    %v983 = vmul.f32 %v982, 1.442695
    %v984 = vpow.pop %v983
    %v985 = vadd.f32 %v984, 1.0
    %v986 = vrcp.pop %v985
    %v987 = vmul.f32 1.0, %v986
    %v988 = vtanh.pop %v981
    %v989 = vmul.f32 %v987, %v833
    %991 = vrot.lane.b32.xlu0 %v988, 64
    %v992 = vpop.permute.xlu0 %991
    %v994 = vmul.f32 %v987, %v992
    %996 = vrot.lane.b32.xlu0 %v994, 32
    %v997 = vpop.permute.xlu0 %996
    %v999 = vadd.f32 %v989, %v997
    %v1000 = vtanh.pop %v999
    %1002 = vrot.lane.b32.xlu0 %v1000, 64
    %v1003 = vpop.permute.xlu0 %1002
    %v1005 = vmul.f32 %v987, %v1003
    %v1006 = vsel %vm853, 1, 0
    %1007 = vset.pattern.permute.xlu0 0
    %1008 = vperm.xlu0 %1007, %v1006
    %v1009 = vpop.permute.xlu0 %1008
    %vm1010 = vcmp.eq.s32.totalorder %v1009, 1
    %v1011 = vsel %vm1010, %v999, %v833
    %v1012 = vsel %vm1010, %v1005, %v834
    %v1013 = vsel %vm1010, %v1005, 0.0
    %1015 = vrot.lane.b32.xlu0 %v933, 32
    %v1016 = vpop.permute.xlu0 %1015
    %s1018 = scalar_lea.vmem [#allocation3], 24
    %1019 = vst.msk [vmem:[%s1018] sm:$0xff] %vm321, %v1016
    %1021 = vrot.lane.b32.xlu0 %v1013, 32
    %v1022 = vpop.permute.xlu0 %1021
    %s1024 = scalar_lea.vmem [#allocation4], 32
    %1025 = vst.msk [vmem:[%s1024] sm:$0xff] %vm321, %v1022
    %v1026 = vld [vmem:[%s850] sm:$0xff]
    %v1027 = vld [vmem:[%s848 + $0x8] sm:$0xff]
    %v1028 = vpack.c.bf16 %v932, %v932
    %1030 = vrot.lane.b32.xlu0 %v1028, 32
    %v1031 = vpop.permute.xlu0 %1030
    %v1033 = vsel %vm321, %v1031, 0
    %1035 = vmatprep.subr.bf16.mxu0 0
    %1036 = vmatpush1.bf16.msra.mxu0 %v317
    %1037 = vmatprep.subr.bf16.mxu0 0
    %1038 = vmatpush1.bf16.msra.mxu0 %v318
    %1039 = vmatprep.subr.bf16.mxu0 0
    %1040 = vmatpush1.bf16.msra.mxu0 0
    %1041 = vmatprep.subr.bf16.mxu0 0
    %1042 = vmatpush1.bf16.msra.mxu0 0
    %1043 = vmatprep.subr.bf16.mxu0 0
    %1044 = vmatpush1.bf16.msra.mxu0 0
    %1045 = vmatprep.subr.bf16.mxu0 0
    %1046 = vmatpush1.bf16.msra.mxu0 0
    %1047 = vmatprep.subr.bf16.mxu0 0
    %1048 = vmatpush1.bf16.msra.mxu0 0
    %1049 = vmatprep.subr.bf16.mxu0 0
    %1050 = vmatpush1.bf16.msra.mxu0 0
    %1051 = vmatprep.subr.bf16.mxu0 0
    %1052 = vmatpush1.bf16.msra.mxu0 0
    %1053 = vmatprep.subr.bf16.mxu0 0
    %1054 = vmatpush1.bf16.msra.mxu0 0
    %1055 = vmatprep.subr.bf16.mxu0 0
    %1056 = vmatpush1.bf16.msra.mxu0 0
    %1057 = vmatprep.subr.bf16.mxu0 0
    %1058 = vmatpush1.bf16.msra.mxu0 0
    %1059 = vmatprep.subr.bf16.mxu0 0
    %1060 = vmatpush1.bf16.msra.mxu0 0
    %1061 = vmatprep.subr.bf16.mxu0 0
    %1062 = vmatpush1.bf16.msra.mxu0 0
    %1063 = vmatprep.subr.bf16.mxu0 0
    %1064 = vmatpush1.bf16.msra.mxu0 0
    %1065 = vmatprep.subr.bf16.mxu0 0
    %1066 = vmatpush1.bf16.msra.mxu0 0
    %1067 = vmatprep.mubr.bf16.mxu0 0
    %1068 = vmatmul.mubr.bf16.gmra.mrb[0].mxu0 %v1033
    %v1069 = vpop.f32.mrb[0].mxu0
    %v1070 = vadd.f32 0.0, %v1069
    %v1071 = vpop.f32.mrb[0].mxu0
    %v1072 = vpop.f32.mrb[0].mxu0
    %v1073 = vpop.f32.mrb[0].mxu0
    %1074 = vdwg.mxu0
    %v1075 = vadd.f32 %v1026, %v1070
    %v1076 = vxor.u32 %v1075, 2147483648
    %v1077 = vmul.f32 %v1076, 1.442695
    %v1078 = vpow.pop %v1077
    %v1079 = vadd.f32 %v1078, 1.0
    %v1080 = vrcp.pop %v1079
    %v1081 = vmul.f32 1.0, %v1080
    %v1082 = vtanh.pop %v1075
    %v1083 = vmul.f32 %v1081, %v931
    %1085 = vrot.lane.b32.xlu0 %v1082, 64
    %v1086 = vpop.permute.xlu0 %1085
    %v1088 = vmul.f32 %v1081, %v1086
    %1090 = vrot.lane.b32.xlu0 %v1088, 32
    %v1091 = vpop.permute.xlu0 %1090
    %v1093 = vadd.f32 %v1083, %v1091
    %v1094 = vtanh.pop %v1093
    %1096 = vrot.lane.b32.xlu0 %v1094, 64
    %v1097 = vpop.permute.xlu0 %1096
    %v1099 = vmul.f32 %v1081, %v1097
    %v1100 = vsel %vm1010, %v1093, %v931
    %v1101 = vsel %vm1010, %v1099, %v932
    %v1102 = vsel %vm1010, %v1099, 0.0
    %v1103 = vpack.c.bf16 %v1012, %v1012
    %1105 = vrot.lane.b32.xlu0 %v1103, 32
    %v1106 = vpop.permute.xlu0 %1105
    %v1108 = vsel %vm321, %v1106, 0
    %1110 = vmatprep.subr.bf16.mxu0 0
    %1111 = vmatpush1.bf16.msra.mxu0 %v405
    %1112 = vmatprep.subr.bf16.mxu0 0
    %1113 = vmatpush1.bf16.msra.mxu0 %v406
    %1114 = vmatprep.subr.bf16.mxu0 0
    %1115 = vmatpush1.bf16.msra.mxu0 0
    %1116 = vmatprep.subr.bf16.mxu0 0
    %1117 = vmatpush1.bf16.msra.mxu0 0
    %1118 = vmatprep.subr.bf16.mxu0 0
    %1119 = vmatpush1.bf16.msra.mxu0 0
    %1120 = vmatprep.subr.bf16.mxu0 0
    %1121 = vmatpush1.bf16.msra.mxu0 0
    %1122 = vmatprep.subr.bf16.mxu0 0
    %1123 = vmatpush1.bf16.msra.mxu0 0
    %1124 = vmatprep.subr.bf16.mxu0 0
    %1125 = vmatpush1.bf16.msra.mxu0 0
    %1126 = vmatprep.subr.bf16.mxu0 0
    %1127 = vmatpush1.bf16.msra.mxu0 0
    %1128 = vmatprep.subr.bf16.mxu0 0
    %1129 = vmatpush1.bf16.msra.mxu0 0
    %1130 = vmatprep.subr.bf16.mxu0 0
    %1131 = vmatpush1.bf16.msra.mxu0 0
    %1132 = vmatprep.subr.bf16.mxu0 0
    %1133 = vmatpush1.bf16.msra.mxu0 0
    %1134 = vmatprep.subr.bf16.mxu0 0
    %1135 = vmatpush1.bf16.msra.mxu0 0
    %1136 = vmatprep.subr.bf16.mxu0 0
    %1137 = vmatpush1.bf16.msra.mxu0 0
    %1138 = vmatprep.subr.bf16.mxu0 0
    %1139 = vmatpush1.bf16.msra.mxu0 0
    %1140 = vmatprep.subr.bf16.mxu0 0
    %1141 = vmatpush1.bf16.msra.mxu0 0
    %1142 = vmatprep.mubr.bf16.mxu0 0
    %1143 = vmatmul.mubr.bf16.gmra.mrb[0].mxu0 %v1108
    %v1144 = vpop.f32.mrb[0].mxu0
    %v1145 = vadd.f32 0.0, %v1144
    %v1146 = vpop.f32.mrb[0].mxu0
    %v1147 = vpop.f32.mrb[0].mxu0
    %v1148 = vpop.f32.mrb[0].mxu0
    %1149 = vdwg.mxu0
    %v1150 = vadd.f32 %v1027, %v1145
    %v1151 = vxor.u32 %v1150, 2147483648
    %v1152 = vmul.f32 %v1151, 1.442695
    %v1153 = vpow.pop %v1152
    %v1154 = vadd.f32 %v1153, 1.0
    %v1155 = vrcp.pop %v1154
    %v1156 = vmul.f32 1.0, %v1155
    %v1157 = vtanh.pop %v1150
    %v1158 = vmul.f32 %v1156, %v1011
    %1160 = vrot.lane.b32.xlu0 %v1157, 64
    %v1161 = vpop.permute.xlu0 %1160
    %v1163 = vmul.f32 %v1156, %v1161
    %1165 = vrot.lane.b32.xlu0 %v1163, 32
    %v1166 = vpop.permute.xlu0 %1165
    %v1168 = vadd.f32 %v1158, %v1166
    %v1169 = vtanh.pop %v1168
    %1171 = vrot.lane.b32.xlu0 %v1169, 64
    %v1172 = vpop.permute.xlu0 %1171
    %v1174 = vmul.f32 %v1156, %v1172
    %v1175 = vsel %vm930, %v1168, %v1011
    %v1176 = vsel %vm930, %v1174, %v1012
    %v1177 = vsel %vm930, %v1174, 0.0
    %1179 = vrot.lane.b32.xlu0 %v1102, 32
    %v1180 = vpop.permute.xlu0 %1179
    %s1182 = scalar_lea.vmem [#allocation3], 32
    %1183 = vst.msk [vmem:[%s1182] sm:$0xff] %vm321, %v1180
    %1185 = vrot.lane.b32.xlu0 %v1177, 32
    %v1186 = vpop.permute.xlu0 %1185
    %s1188 = scalar_lea.vmem [#allocation4], 24
    %1189 = vst.msk [vmem:[%s1188] sm:$0xff] %vm321, %v1186
    %v1190 = vld [vmem:[%s672] sm:$0xff]
    %v1191 = vld [vmem:[%s670 + $0x8] sm:$0xff]
    %v1192 = vpack.c.bf16 %v1101, %v1101
    %1194 = vrot.lane.b32.xlu0 %v1192, 32
    %v1195 = vpop.permute.xlu0 %1194
    %v1197 = vsel %vm321, %v1195, 0
    %1199 = vmatprep.subr.bf16.mxu0 0
    %1200 = vmatpush1.bf16.msra.mxu0 %v317
    %1201 = vmatprep.subr.bf16.mxu0 0
    %1202 = vmatpush1.bf16.msra.mxu0 %v318
    %1203 = vmatprep.subr.bf16.mxu0 0
    %1204 = vmatpush1.bf16.msra.mxu0 0
    %1205 = vmatprep.subr.bf16.mxu0 0
    %1206 = vmatpush1.bf16.msra.mxu0 0
    %1207 = vmatprep.subr.bf16.mxu0 0
    %1208 = vmatpush1.bf16.msra.mxu0 0
    %1209 = vmatprep.subr.bf16.mxu0 0
    %1210 = vmatpush1.bf16.msra.mxu0 0
    %1211 = vmatprep.subr.bf16.mxu0 0
    %1212 = vmatpush1.bf16.msra.mxu0 0
    %1213 = vmatprep.subr.bf16.mxu0 0
    %1214 = vmatpush1.bf16.msra.mxu0 0
    %1215 = vmatprep.subr.bf16.mxu0 0
    %1216 = vmatpush1.bf16.msra.mxu0 0
    %1217 = vmatprep.subr.bf16.mxu0 0
    %1218 = vmatpush1.bf16.msra.mxu0 0
    %1219 = vmatprep.subr.bf16.mxu0 0
    %1220 = vmatpush1.bf16.msra.mxu0 0
    %1221 = vmatprep.subr.bf16.mxu0 0
    %1222 = vmatpush1.bf16.msra.mxu0 0
    %1223 = vmatprep.subr.bf16.mxu0 0
    %1224 = vmatpush1.bf16.msra.mxu0 0
    %1225 = vmatprep.subr.bf16.mxu0 0
    %1226 = vmatpush1.bf16.msra.mxu0 0
    %1227 = vmatprep.subr.bf16.mxu0 0
    %1228 = vmatpush1.bf16.msra.mxu0 0
    %1229 = vmatprep.subr.bf16.mxu0 0
    %1230 = vmatpush1.bf16.msra.mxu0 0
    %1231 = vmatprep.mubr.bf16.mxu0 0
    %1232 = vmatmul.mubr.bf16.gmra.mrb[0].mxu0 %v1197
    %v1233 = vpop.f32.mrb[0].mxu0
    %v1234 = vadd.f32 0.0, %v1233
    %v1235 = vpop.f32.mrb[0].mxu0
    %v1236 = vpop.f32.mrb[0].mxu0
    %v1237 = vpop.f32.mrb[0].mxu0
    %1238 = vdwg.mxu0
    %v1239 = vadd.f32 %v1190, %v1234
    %v1240 = vxor.u32 %v1239, 2147483648
    %v1241 = vmul.f32 %v1240, 1.442695
    %v1242 = vpow.pop %v1241
    %v1243 = vadd.f32 %v1242, 1.0
    %v1244 = vrcp.pop %v1243
    %v1245 = vmul.f32 1.0, %v1244
    %v1246 = vtanh.pop %v1239
    %v1247 = vmul.f32 %v1245, %v1100
    %1249 = vrot.lane.b32.xlu0 %v1246, 64
    %v1250 = vpop.permute.xlu0 %1249
    %v1252 = vmul.f32 %v1245, %v1250
    %1254 = vrot.lane.b32.xlu0 %v1252, 32
    %v1255 = vpop.permute.xlu0 %1254
    %v1257 = vadd.f32 %v1247, %v1255
    %v1258 = vtanh.pop %v1257
    %1260 = vrot.lane.b32.xlu0 %v1258, 64
    %v1261 = vpop.permute.xlu0 %1260
    %v1263 = vmul.f32 %v1245, %v1261
    %v1264 = vsel %vm832, %v1257, %v1100
    %v1265 = vsel %vm832, %v1263, %v1101
    %v1266 = vsel %vm832, %v1263, 0.0
    %v1267 = vpack.c.bf16 %v1176, %v1176
    %1269 = vrot.lane.b32.xlu0 %v1267, 32
    %v1270 = vpop.permute.xlu0 %1269
    %v1272 = vsel %vm321, %v1270, 0
    %1274 = vmatprep.subr.bf16.mxu0 0
    %1275 = vmatpush1.bf16.msra.mxu0 %v405
    %1276 = vmatprep.subr.bf16.mxu0 0
    %1277 = vmatpush1.bf16.msra.mxu0 %v406
    %1278 = vmatprep.subr.bf16.mxu0 0
    %1279 = vmatpush1.bf16.msra.mxu0 0
    %1280 = vmatprep.subr.bf16.mxu0 0
    %1281 = vmatpush1.bf16.msra.mxu0 0
    %1282 = vmatprep.subr.bf16.mxu0 0
    %1283 = vmatpush1.bf16.msra.mxu0 0
    %1284 = vmatprep.subr.bf16.mxu0 0
    %1285 = vmatpush1.bf16.msra.mxu0 0
    %1286 = vmatprep.subr.bf16.mxu0 0
    %1287 = vmatpush1.bf16.msra.mxu0 0
    %1288 = vmatprep.subr.bf16.mxu0 0
    %1289 = vmatpush1.bf16.msra.mxu0 0
    %1290 = vmatprep.subr.bf16.mxu0 0
    %1291 = vmatpush1.bf16.msra.mxu0 0
    %1292 = vmatprep.subr.bf16.mxu0 0
    %1293 = vmatpush1.bf16.msra.mxu0 0
    %1294 = vmatprep.subr.bf16.mxu0 0
    %1295 = vmatpush1.bf16.msra.mxu0 0
    %1296 = vmatprep.subr.bf16.mxu0 0
    %1297 = vmatpush1.bf16.msra.mxu0 0
    %1298 = vmatprep.subr.bf16.mxu0 0
    %1299 = vmatpush1.bf16.msra.mxu0 0
    %1300 = vmatprep.subr.bf16.mxu0 0
    %1301 = vmatpush1.bf16.msra.mxu0 0
    %1302 = vmatprep.subr.bf16.mxu0 0
    %1303 = vmatpush1.bf16.msra.mxu0 0
    %1304 = vmatprep.subr.bf16.mxu0 0
    %1305 = vmatpush1.bf16.msra.mxu0 0
    %1306 = vmatprep.mubr.bf16.mxu0 0
    %1307 = vmatmul.mubr.bf16.gmra.mrb[0].mxu0 %v1272
    %v1308 = vpop.f32.mrb[0].mxu0
    %v1309 = vadd.f32 0.0, %v1308
    %v1310 = vpop.f32.mrb[0].mxu0
    %v1311 = vpop.f32.mrb[0].mxu0
    %v1312 = vpop.f32.mrb[0].mxu0
    %1313 = vdwg.mxu0
    %v1314 = vadd.f32 %v1191, %v1309
    %v1315 = vxor.u32 %v1314, 2147483648
    %v1316 = vmul.f32 %v1315, 1.442695
    %v1317 = vpow.pop %v1316
    %v1318 = vadd.f32 %v1317, 1.0
    %v1319 = vrcp.pop %v1318
    %v1320 = vmul.f32 1.0, %v1319
    %v1321 = vtanh.pop %v1314
    %v1322 = vmul.f32 %v1320, %v1175
    %1324 = vrot.lane.b32.xlu0 %v1321, 64
    %v1325 = vpop.permute.xlu0 %1324
    %v1327 = vmul.f32 %v1320, %v1325
    %1329 = vrot.lane.b32.xlu0 %v1327, 32
    %v1330 = vpop.permute.xlu0 %1329
    %v1332 = vadd.f32 %v1322, %v1330
    %v1333 = vtanh.pop %v1332
    %1335 = vrot.lane.b32.xlu0 %v1333, 64
    %v1336 = vpop.permute.xlu0 %1335
    %v1338 = vmul.f32 %v1320, %v1336
    %v1339 = vsel %vm752, %v1332, %v1175
    %v1340 = vsel %vm752, %v1338, %v1176
    %v1341 = vsel %vm752, %v1338, 0.0
    %1343 = vrot.lane.b32.xlu0 %v1266, 32
    %v1344 = vpop.permute.xlu0 %1343
    %s1346 = scalar_lea.vmem [#allocation3], 40
    %1347 = vst.msk [vmem:[%s1346] sm:$0xff] %vm321, %v1344
    %1349 = vrot.lane.b32.xlu0 %v1341, 32
    %v1350 = vpop.permute.xlu0 %1349
    %s1352 = scalar_lea.vmem [#allocation4], 16
    %1353 = vst.msk [vmem:[%s1352] sm:$0xff] %vm321, %v1350
    %v1354 = vld [vmem:[%s494] sm:$0xff]
    %v1355 = vld [vmem:[%s492 + $0x8] sm:$0xff]
    %v1356 = vpack.c.bf16 %v1265, %v1265
    %1358 = vrot.lane.b32.xlu0 %v1356, 32
    %v1359 = vpop.permute.xlu0 %1358
    %v1361 = vsel %vm321, %v1359, 0
    %1363 = vmatprep.subr.bf16.mxu0 0
    %1364 = vmatpush1.bf16.msra.mxu0 %v317
    %1365 = vmatprep.subr.bf16.mxu0 0
    %1366 = vmatpush1.bf16.msra.mxu0 %v318
    %1367 = vmatprep.subr.bf16.mxu0 0
    %1368 = vmatpush1.bf16.msra.mxu0 0
    %1369 = vmatprep.subr.bf16.mxu0 0
    %1370 = vmatpush1.bf16.msra.mxu0 0
    %1371 = vmatprep.subr.bf16.mxu0 0
    %1372 = vmatpush1.bf16.msra.mxu0 0
    %1373 = vmatprep.subr.bf16.mxu0 0
    %1374 = vmatpush1.bf16.msra.mxu0 0
    %1375 = vmatprep.subr.bf16.mxu0 0
    %1376 = vmatpush1.bf16.msra.mxu0 0
    %1377 = vmatprep.subr.bf16.mxu0 0
    %1378 = vmatpush1.bf16.msra.mxu0 0
    %1379 = vmatprep.subr.bf16.mxu0 0
    %1380 = vmatpush1.bf16.msra.mxu0 0
    %1381 = vmatprep.subr.bf16.mxu0 0
    %1382 = vmatpush1.bf16.msra.mxu0 0
    %1383 = vmatprep.subr.bf16.mxu0 0
    %1384 = vmatpush1.bf16.msra.mxu0 0
    %1385 = vmatprep.subr.bf16.mxu0 0
    %1386 = vmatpush1.bf16.msra.mxu0 0
    %1387 = vmatprep.subr.bf16.mxu0 0
    %1388 = vmatpush1.bf16.msra.mxu0 0
    %1389 = vmatprep.subr.bf16.mxu0 0
    %1390 = vmatpush1.bf16.msra.mxu0 0
    %1391 = vmatprep.subr.bf16.mxu0 0
    %1392 = vmatpush1.bf16.msra.mxu0 0
    %1393 = vmatprep.subr.bf16.mxu0 0
    %1394 = vmatpush1.bf16.msra.mxu0 0
    %1395 = vmatprep.mubr.bf16.mxu0 0
    %1396 = vmatmul.mubr.bf16.gmra.mrb[0].mxu0 %v1361
    %v1397 = vpop.f32.mrb[0].mxu0
    %v1398 = vadd.f32 0.0, %v1397
    %v1399 = vpop.f32.mrb[0].mxu0
    %v1400 = vpop.f32.mrb[0].mxu0
    %v1401 = vpop.f32.mrb[0].mxu0
    %1402 = vdwg.mxu0
    %v1403 = vadd.f32 %v1354, %v1398
    %v1404 = vxor.u32 %v1403, 2147483648
    %v1405 = vmul.f32 %v1404, 1.442695
    %v1406 = vpow.pop %v1405
    %v1407 = vadd.f32 %v1406, 1.0
    %v1408 = vrcp.pop %v1407
    %v1409 = vmul.f32 1.0, %v1408
    %v1410 = vtanh.pop %v1403
    %v1411 = vmul.f32 %v1409, %v1264
    %1413 = vrot.lane.b32.xlu0 %v1410, 64
    %v1414 = vpop.permute.xlu0 %1413
    %v1416 = vmul.f32 %v1409, %v1414
    %1418 = vrot.lane.b32.xlu0 %v1416, 32
    %v1419 = vpop.permute.xlu0 %1418
    %v1421 = vadd.f32 %v1411, %v1419
    %v1422 = vtanh.pop %v1421
    %1424 = vrot.lane.b32.xlu0 %v1422, 64
    %v1425 = vpop.permute.xlu0 %1424
    %v1427 = vmul.f32 %v1409, %v1425
    %v1428 = vsel %vm654, %v1421, %v1264
    %v1429 = vsel %vm654, %v1427, %v1265
    %v1430 = vsel %vm654, %v1427, 0.0
    %v1431 = vpack.c.bf16 %v1340, %v1340
    %1433 = vrot.lane.b32.xlu0 %v1431, 32
    %v1434 = vpop.permute.xlu0 %1433
    %v1436 = vsel %vm321, %v1434, 0
    %1438 = vmatprep.subr.bf16.mxu0 0
    %1439 = vmatpush1.bf16.msra.mxu0 %v405
    %1440 = vmatprep.subr.bf16.mxu0 0
    %1441 = vmatpush1.bf16.msra.mxu0 %v406
    %1442 = vmatprep.subr.bf16.mxu0 0
    %1443 = vmatpush1.bf16.msra.mxu0 0
    %1444 = vmatprep.subr.bf16.mxu0 0
    %1445 = vmatpush1.bf16.msra.mxu0 0
    %1446 = vmatprep.subr.bf16.mxu0 0
    %1447 = vmatpush1.bf16.msra.mxu0 0
    %1448 = vmatprep.subr.bf16.mxu0 0
    %1449 = vmatpush1.bf16.msra.mxu0 0
    %1450 = vmatprep.subr.bf16.mxu0 0
    %1451 = vmatpush1.bf16.msra.mxu0 0
    %1452 = vmatprep.subr.bf16.mxu0 0
    %1453 = vmatpush1.bf16.msra.mxu0 0
    %1454 = vmatprep.subr.bf16.mxu0 0
    %1455 = vmatpush1.bf16.msra.mxu0 0
    %1456 = vmatprep.subr.bf16.mxu0 0
    %1457 = vmatpush1.bf16.msra.mxu0 0
    %1458 = vmatprep.subr.bf16.mxu0 0
    %1459 = vmatpush1.bf16.msra.mxu0 0
    %1460 = vmatprep.subr.bf16.mxu0 0
    %1461 = vmatpush1.bf16.msra.mxu0 0
    %1462 = vmatprep.subr.bf16.mxu0 0
    %1463 = vmatpush1.bf16.msra.mxu0 0
    %1464 = vmatprep.subr.bf16.mxu0 0
    %1465 = vmatpush1.bf16.msra.mxu0 0
    %1466 = vmatprep.subr.bf16.mxu0 0
    %1467 = vmatpush1.bf16.msra.mxu0 0
    %1468 = vmatprep.subr.bf16.mxu0 0
    %1469 = vmatpush1.bf16.msra.mxu0 0
    %1470 = vmatprep.mubr.bf16.mxu0 0
    %1471 = vmatmul.mubr.bf16.gmra.mrb[0].mxu0 %v1436
    %v1472 = vpop.f32.mrb[0].mxu0
    %v1473 = vadd.f32 0.0, %v1472
    %v1474 = vpop.f32.mrb[0].mxu0
    %v1475 = vpop.f32.mrb[0].mxu0
    %v1476 = vpop.f32.mrb[0].mxu0
    %1477 = vdwg.mxu0
    %v1478 = vadd.f32 %v1355, %v1473
    %v1479 = vxor.u32 %v1478, 2147483648
    %v1480 = vmul.f32 %v1479, 1.442695
    %v1481 = vpow.pop %v1480
    %v1482 = vadd.f32 %v1481, 1.0
    %v1483 = vrcp.pop %v1482
    %v1484 = vmul.f32 1.0, %v1483
    %v1485 = vtanh.pop %v1478
    %v1486 = vmul.f32 %v1484, %v1339
    %1488 = vrot.lane.b32.xlu0 %v1485, 64
    %v1489 = vpop.permute.xlu0 %1488
    %v1491 = vmul.f32 %v1484, %v1489
    %1493 = vrot.lane.b32.xlu0 %v1491, 32
    %v1494 = vpop.permute.xlu0 %1493
    %v1496 = vadd.f32 %v1486, %v1494
    %v1497 = vtanh.pop %v1496
    %1499 = vrot.lane.b32.xlu0 %v1497, 64
    %v1500 = vpop.permute.xlu0 %1499
    %v1502 = vmul.f32 %v1484, %v1500
    %v1503 = vsel %vm574, %v1496, %v1339
    %v1504 = vsel %vm574, %v1502, %v1340
    %v1505 = vsel %vm574, %v1502, 0.0
    %1507 = vrot.lane.b32.xlu0 %v1430, 32
    %v1508 = vpop.permute.xlu0 %1507
    %s1510 = scalar_lea.vmem [#allocation3], 48
    %1511 = vst.msk [vmem:[%s1510] sm:$0xff] %vm321, %v1508
    %1513 = vrot.lane.b32.xlu0 %v1505, 32
    %v1514 = vpop.permute.xlu0 %1513
    %s1516 = scalar_lea.vmem [#allocation4], 8
    %1517 = vst.msk [vmem:[%s1516] sm:$0xff] %vm321, %v1514
    %v1518 = vld [vmem:[%s305] sm:$0xff]
    %v1519 = vld [vmem:[#allocation2 + $0x8] sm:$0xff]
    %v1520 = vpack.c.bf16 %v1429, %v1429
    %1522 = vrot.lane.b32.xlu0 %v1520, 32
    %v1523 = vpop.permute.xlu0 %1522
    %v1525 = vsel %vm321, %v1523, 0
    %1527 = vmatprep.subr.bf16.mxu0 0
    %1528 = vmatpush1.bf16.msra.mxu0 %v317
    %1529 = vmatprep.subr.bf16.mxu0 0
    %1530 = vmatpush1.bf16.msra.mxu0 %v318
    %1531 = vmatprep.subr.bf16.mxu0 0
    %1532 = vmatpush1.bf16.msra.mxu0 0
    %1533 = vmatprep.subr.bf16.mxu0 0
    %1534 = vmatpush1.bf16.msra.mxu0 0
    %1535 = vmatprep.subr.bf16.mxu0 0
    %1536 = vmatpush1.bf16.msra.mxu0 0
    %1537 = vmatprep.subr.bf16.mxu0 0
    %1538 = vmatpush1.bf16.msra.mxu0 0
    %1539 = vmatprep.subr.bf16.mxu0 0
    %1540 = vmatpush1.bf16.msra.mxu0 0
    %1541 = vmatprep.subr.bf16.mxu0 0
    %1542 = vmatpush1.bf16.msra.mxu0 0
    %1543 = vmatprep.subr.bf16.mxu0 0
    %1544 = vmatpush1.bf16.msra.mxu0 0
    %1545 = vmatprep.subr.bf16.mxu0 0
    %1546 = vmatpush1.bf16.msra.mxu0 0
    %1547 = vmatprep.subr.bf16.mxu0 0
    %1548 = vmatpush1.bf16.msra.mxu0 0
    %1549 = vmatprep.subr.bf16.mxu0 0
    %1550 = vmatpush1.bf16.msra.mxu0 0
    %1551 = vmatprep.subr.bf16.mxu0 0
    %1552 = vmatpush1.bf16.msra.mxu0 0
    %1553 = vmatprep.subr.bf16.mxu0 0
    %1554 = vmatpush1.bf16.msra.mxu0 0
    %1555 = vmatprep.subr.bf16.mxu0 0
    %1556 = vmatpush1.bf16.msra.mxu0 0
    %1557 = vmatprep.subr.bf16.mxu0 0
    %1558 = vmatpush1.bf16.msra.mxu0 0
    %1559 = vmatprep.mubr.bf16.mxu0 0
    %1560 = vmatmul.mubr.bf16.gmra.mrb[0].mxu0 %v1525
    %v1561 = vpop.f32.mrb[0].mxu0
    %v1562 = vadd.f32 0.0, %v1561
    %v1563 = vpop.f32.mrb[0].mxu0
    %v1564 = vpop.f32.mrb[0].mxu0
    %v1565 = vpop.f32.mrb[0].mxu0
    %1566 = vdwg.mxu0
    %v1567 = vadd.f32 %v1518, %v1562
    %v1568 = vxor.u32 %v1567, 2147483648
    %v1569 = vmul.f32 %v1568, 1.442695
    %v1570 = vpow.pop %v1569
    %v1571 = vadd.f32 %v1570, 1.0
    %v1572 = vrcp.pop %v1571
    %v1573 = vmul.f32 1.0, %v1572
    %v1574 = vtanh.pop %v1567
    %v1575 = vmul.f32 %v1573, %v1428
    %1577 = vrot.lane.b32.xlu0 %v1574, 64
    %v1578 = vpop.permute.xlu0 %1577
    %v1580 = vmul.f32 %v1573, %v1578
    %1582 = vrot.lane.b32.xlu0 %v1580, 32
    %v1583 = vpop.permute.xlu0 %1582
    %v1585 = vadd.f32 %v1575, %v1583
    %v1586 = vtanh.pop %v1585
    %1588 = vrot.lane.b32.xlu0 %v1586, 64
    %v1589 = vpop.permute.xlu0 %1588
    %v1591 = vmul.f32 %v1573, %v1589
    %v1592 = vsel %vm478, %v1591, 0.0
    %v1593 = vpack.c.bf16 %v1504, %v1504
    %1595 = vrot.lane.b32.xlu0 %v1593, 32
    %v1596 = vpop.permute.xlu0 %1595
    %v1598 = vsel %vm321, %v1596, 0
    %1600 = vmatprep.subr.bf16.mxu0 0
    %1601 = vmatpush1.bf16.msra.mxu0 %v405
    %1602 = vmatprep.subr.bf16.mxu0 0
    %1603 = vmatpush1.bf16.msra.mxu0 %v406
    %1604 = vmatprep.subr.bf16.mxu0 0
    %1605 = vmatpush1.bf16.msra.mxu0 0
    %1606 = vmatprep.subr.bf16.mxu0 0
    %1607 = vmatpush1.bf16.msra.mxu0 0
    %1608 = vmatprep.subr.bf16.mxu0 0
    %1609 = vmatpush1.bf16.msra.mxu0 0
    %1610 = vmatprep.subr.bf16.mxu0 0
    %1611 = vmatpush1.bf16.msra.mxu0 0
    %1612 = vmatprep.subr.bf16.mxu0 0
    %1613 = vmatpush1.bf16.msra.mxu0 0
    %1614 = vmatprep.subr.bf16.mxu0 0
    %1615 = vmatpush1.bf16.msra.mxu0 0
    %1616 = vmatprep.subr.bf16.mxu0 0
    %1617 = vmatpush1.bf16.msra.mxu0 0
    %1618 = vmatprep.subr.bf16.mxu0 0
    %1619 = vmatpush1.bf16.msra.mxu0 0
    %1620 = vmatprep.subr.bf16.mxu0 0
    %1621 = vmatpush1.bf16.msra.mxu0 0
    %1622 = vmatprep.subr.bf16.mxu0 0
    %1623 = vmatpush1.bf16.msra.mxu0 0
    %1624 = vmatprep.subr.bf16.mxu0 0
    %1625 = vmatpush1.bf16.msra.mxu0 0
    %1626 = vmatprep.subr.bf16.mxu0 0
    %1627 = vmatpush1.bf16.msra.mxu0 0
    %1628 = vmatprep.subr.bf16.mxu0 0
    %1629 = vmatpush1.bf16.msra.mxu0 0
    %1630 = vmatprep.subr.bf16.mxu0 0
    %1631 = vmatpush1.bf16.msra.mxu0 0
    %1632 = vmatprep.mubr.bf16.mxu0 0
    %1633 = vmatmul.mubr.bf16.gmra.mrb[0].mxu0 %v1598
    %v1634 = vpop.f32.mrb[0].mxu0
    %v1635 = vadd.f32 0.0, %v1634
    %v1636 = vpop.f32.mrb[0].mxu0
    %v1637 = vpop.f32.mrb[0].mxu0
    %v1638 = vpop.f32.mrb[0].mxu0
    %1639 = vdwg.mxu0
    %v1640 = vadd.f32 %v1519, %v1635
    %v1641 = vxor.u32 %v1640, 2147483648
    %v1642 = vmul.f32 %v1641, 1.442695
    %v1643 = vpow.pop %v1642
    %v1644 = vadd.f32 %v1643, 1.0
    %v1645 = vrcp.pop %v1644
    %v1646 = vmul.f32 1.0, %v1645
    %v1647 = vtanh.pop %v1640
    %v1648 = vmul.f32 %v1646, %v1503
    %1650 = vrot.lane.b32.xlu0 %v1647, 64
    %v1651 = vpop.permute.xlu0 %1650
    %v1653 = vmul.f32 %v1646, %v1651
    %1655 = vrot.lane.b32.xlu0 %v1653, 32
    %v1656 = vpop.permute.xlu0 %1655
    %v1658 = vadd.f32 %v1648, %v1656
    %v1659 = vtanh.pop %v1658
    %1661 = vrot.lane.b32.xlu0 %v1659, 64
    %v1662 = vpop.permute.xlu0 %1661
    %v1664 = vmul.f32 %v1646, %v1662
    %v1665 = vsel %vm394, %v1664, 0.0
    %1667 = vrot.lane.b32.xlu0 %v1592, 32
    %v1668 = vpop.permute.xlu0 %1667
    %s1670 = scalar_lea.vmem [#allocation3], 56
    %1671 = vst.msk [vmem:[%s1670] sm:$0xff] %vm321, %v1668
    %1673 = vrot.lane.b32.xlu0 %v1665, 32
    %v1674 = vpop.permute.xlu0 %1673
    %1676 = vst.msk [vmem:[#allocation4] sm:$0xff] %vm321, %v1674
    %v1677 = vld [vmem:[#allocation3] sm:$0xff]
    %v1678 = vld [vmem:[#allocation3 + $0x8] sm:$0xff]
    %v1679 = vld [vmem:[#allocation3 + $0x10] sm:$0xff]
    %v1680 = vld [vmem:[#allocation3 + $0x18] sm:$0xff]
    %v1681 = vld [vmem:[#allocation3 + $0x20] sm:$0xff]
    %v1682 = vld [vmem:[#allocation3 + $0x28] sm:$0xff]
    %v1683 = vld [vmem:[#allocation3 + $0x30] sm:$0xff]
    %v1684 = vld [vmem:[#allocation3 + $0x38] sm:$0xff]
    %v1685 = vld [vmem:[#allocation4] sm:$0xff]
    %v1686 = vld [vmem:[#allocation4 + $0x8] sm:$0xff]
    %v1687 = vld [vmem:[#allocation4 + $0x10] sm:$0xff]
    %v1688 = vld [vmem:[#allocation4 + $0x18] sm:$0xff]
    %v1689 = vld [vmem:[#allocation4 + $0x20] sm:$0xff]
    %v1690 = vld [vmem:[#allocation4 + $0x28] sm:$0xff]
    %v1691 = vld [vmem:[#allocation4 + $0x30] sm:$0xff]
    %v1692 = vld [vmem:[#allocation4 + $0x38] sm:$0xff]
    %1701 = vrot.lane.b32.xlu0 %v1685, 32
    %v1702 = vpop.permute.xlu0 %1701
    %1703 = vrot.lane.b32.xlu0 %v1686, 32
    %v1704 = vpop.permute.xlu0 %1703
    %1705 = vrot.lane.b32.xlu0 %v1687, 32
    %v1706 = vpop.permute.xlu0 %1705
    %1707 = vrot.lane.b32.xlu0 %v1688, 32
    %v1708 = vpop.permute.xlu0 %1707
    %1709 = vrot.lane.b32.xlu0 %v1689, 32
    %v1710 = vpop.permute.xlu0 %1709
    %1711 = vrot.lane.b32.xlu0 %v1690, 32
    %v1712 = vpop.permute.xlu0 %1711
    %1713 = vrot.lane.b32.xlu0 %v1691, 32
    %v1714 = vpop.permute.xlu0 %1713
    %1715 = vrot.lane.b32.xlu0 %v1692, 32
    %v1716 = vpop.permute.xlu0 %1715
    %v1725 = vsel %vm321, %v1677, %v1702
    %v1726 = vsel %vm321, %v1678, %v1704
    %v1727 = vsel %vm321, %v1679, %v1706
    %v1728 = vsel %vm321, %v1680, %v1708
    %v1729 = vsel %vm321, %v1681, %v1710
    %v1730 = vsel %vm321, %v1682, %v1712
    %v1731 = vsel %vm321, %v1683, %v1714
    %v1732 = vsel %vm321, %v1684, %v1716
    %vm1733 = vcmask 523264
    %v1734 = vsel %vm1733, %v1725, 0.0
    %v1735 = vsel %vm1733, %v1726, 0.0
    %v1736 = vsel %vm1733, %v1727, 0.0
    %v1737 = vsel %vm1733, %v1728, 0.0
    %v1738 = vsel %vm1733, %v1729, 0.0
    %v1739 = vsel %vm1733, %v1730, 0.0
    %v1740 = vsel %vm1733, %v1731, 0.0
    %v1741 = vsel %vm1733, %v1732, 0.0
    %1742 = vst [vmem:[#allocation11] sm:$0xff] %v1734
    %1743 = vst [vmem:[#allocation11 + $0x8] sm:$0xff] %v1735
    %1744 = vst [vmem:[#allocation11 + $0x10] sm:$0xff] %v1736
    %1745 = vst [vmem:[#allocation11 + $0x18] sm:$0xff] %v1737
    %1746 = vst [vmem:[#allocation11 + $0x20] sm:$0xff] %v1738
    %1747 = vst [vmem:[#allocation11 + $0x28] sm:$0xff] %v1739
    %1748 = vst [vmem:[#allocation11 + $0x30] sm:$0xff] %v1740
    %1749 = vst [vmem:[#allocation11 + $0x38] sm:$0xff] %v1741
    // Predicated region
    $region38: #{tpu_custom_call.1} parent=1 // pred_check
      _
    $region39: #{tpu_custom_call.1} parent=1 // pred_check_branch
      %1751 = sbr.rel (0) target = $region41
    $region40: #{tpu_custom_call.1} parent=1 // pred_region
      %s1753 = ssub.s32 1024, 1024
      %1754 = vsyncadd [#allocation7], %s1753
      %s1755 = sshll.u32 [#allocation11], 4
      %s1756 = int_to_ptr.vmem [resolvable:$true] %s1755
      %1761 = dma.vmem_to_hbm [thread:$0]  %s1756, 1024, %s6, [#allocation7], 128, 128, 8
    $region41: #{tpu_custom_call.1} parent=1 // pred_fallthru
      _
    // Predicated region
    $region42: #{tpu_custom_call.1} parent=1 // pred_check
      _
    $region43: #{tpu_custom_call.1} parent=1 // pred_check_branch
      %1763 = sbr.rel (0) target = $region45
    $region44: #{tpu_custom_call.1} parent=1 // pred_region
      %1764 = dma.done [#allocation7], 1024
    $region45: #{tpu_custom_call.1} parent=1 // pred_fallthru
      _
    %1765 = vsyncpa [#allocation6], 1
    %1766 = vsyncpa [#allocation9], 1
    %1767 = vsyncpa [#allocation7], 1

</llo_original>
